<compile_context>
chip_gen: v7x
topology: tpu7x:2x2x1
jax: 0.10.0
libtpu: 0.0.40
codegen_flags: <defaults>
</compile_context>

<pallas_src>
import functools

import numpy as np

import jax
import jax.numpy as jnp
from jax import lax
from jax.experimental import pallas as pl
from jax.experimental.pallas import tpu as pltpu


def _round_up(v, m):
    return (v + m - 1) // m * m


# ----------------------------- Pallas kernel --------------------------------

def _convblock_kernel(x_ref, w_ref, p_ref, m_ref, o_ref, *,
                      tap_offsets, t_pad, inv_count, eps, normalize, relu):
    """One batch element per grid step.

    x_ref: (1, C, L_pad)      reflect-padded input, flattened spatial (compute dtype)
    w_ref: (K*K, C_out, C)    per-tap weight matrices (compute dtype)
    p_ref: (C_out, 2)         [gamma, beta] if normalize else [bias, unused] (f32)
    m_ref: (1, T_pad)         0/1 validity mask over flat output positions (f32)
    o_ref: (1, C_out, T_pad)  conv(+norm)(+relu) on the padded flat grid
    """
    x = x_ref[0]                                              # (C, L_pad)

    # K*K-tap accumulation: each tap is a (C_out, C) @ (C, T_pad) MXU matmul on
    # a statically shifted lane-slice of the flat padded input; f32 accumulate.
    acc = None
    for q, off in enumerate(tap_offsets):
        part = jnp.dot(w_ref[q], x[:, off:off + t_pad],
                       preferred_element_type=jnp.float32)    # (C_out, T_pad)
        acc = part if acc is None else acc + part
    y = acc

    if normalize:
        # One-pass masked statistics (XLU reductions, rsqrt on the EUP).
        m = m_ref[...]                                        # (1, T_pad) 0/1
        ym = y * m
        s1 = jnp.sum(ym, axis=1, keepdims=True)               # (C_out, 1)
        s2 = jnp.sum(ym * ym, axis=1, keepdims=True)
        mean = s1 * inv_count
        var = jnp.maximum(s2 * inv_count - mean * mean, 0.0)
        scale = p_ref[:, 0:1] * lax.rsqrt(var + eps)          # gamma folded in
        y = y * scale + (p_ref[:, 1:2] - mean * scale)        # single FMA/elem
    else:
        y = y + p_ref[:, 0:1]                                 # conv bias

    if relu:
        y = jnp.maximum(y, 0.0)

    o_ref[0] = y.astype(o_ref.dtype)


# ------------------------------ JAX wrapper ----------------------------------

def conv_block_forward(x, weight, bias, gamma=None, beta=None, *,
                       kernel_size, stride=1, upsample=False,
                       normalize=True, relu=True, eps=1e-5,
                       compute_dtype=jnp.bfloat16, out_dtype=None):
    """x: (N, C_in, H, W) NCHW. weight: (C_out, C_in, K, K) PyTorch layout."""
    N, C_in, H, W = x.shape
    C_out = weight.shape[0]
    K = kernel_size
    out_dtype = x.dtype if out_dtype is None else out_dtype

    # Cast BEFORE upsample / pad so every wrapper intermediate is compute-dtype.
    x = x.astype(compute_dtype)

    if upsample:
        # F.interpolate(scale_factor=2), default mode='nearest'.
        x = jnp.repeat(jnp.repeat(x, 2, axis=2), 2, axis=3)
        H, W = 2 * H, 2 * W

    pad = K // 2
    x_pad = jnp.pad(x, ((0, 0), (0, 0), (pad, pad), (pad, pad)), mode="reflect")
    Hp, Wp = H + 2 * pad, W + 2 * pad

    # Dense (stride-1) output positions on the padded grid, flattened with row
    # stride Wp; valid columns are < Wo1.  Stride > 1 is handled by masking the
    # statistics to strided positions and subsampling after the kernel.
    Ho1, Wo1 = Hp - K + 1, Wp - K + 1
    Ho = (Hp - K) // stride + 1
    Wo = (Wp - K) // stride + 1

    t_valid = Ho1 * Wp
    t_pad = _round_up(t_valid, 128)                    # lane-dense stores
    max_off = (K - 1) * Wp + (K - 1)
    l_pad = _round_up(max(Hp * Wp, max_off + t_pad), 128)

    x_flat = x_pad.reshape(N, C_in, Hp * Wp)
    x_flat = jnp.pad(x_flat, ((0, 0), (0, 0), (0, l_pad - Hp * Wp)))

    # Per-tap (C_out, C_in) weight matrices; tap q = i*K + j <-> flat offset i*Wp + j.
    w_taps = jnp.transpose(weight, (2, 3, 0, 1)).reshape(K * K, C_out, C_in)
    w_taps = w_taps.astype(compute_dtype)
    tap_offsets = tuple(i * Wp + j for i in range(K) for j in range(K))

    # Per-channel params: [gamma, beta] under InstanceNorm (the conv bias is
    # exactly cancelled by the mean subtraction, so it is neither added nor
    # DMA'd), [bias, 0] otherwise.
    if normalize:
        g = jnp.ones((C_out,), jnp.float32) if gamma is None else gamma.astype(jnp.float32)
        b2 = jnp.zeros((C_out,), jnp.float32) if beta is None else beta.astype(jnp.float32)
        params = jnp.stack([g, b2], axis=1)
    else:
        params = jnp.stack([bias.astype(jnp.float32),
                            jnp.zeros((C_out,), jnp.float32)], axis=1)

    # 0/1 mask over the padded flat grid marking positions belonging to the
    # (strided) output; restricts InstanceNorm statistics to real pixels.
    t = np.arange(t_pad)
    row, col = t // Wp, t % Wp
    valid = (row < Ho1) & (col < Wo1) & (row % stride == 0) & (col % stride == 0)
    mask = jnp.asarray(valid.astype(np.float32)[None, :])
    count = int(valid.sum())
    assert count == Ho * Wo

    kernel = functools.partial(
        _convblock_kernel, tap_offsets=tap_offsets, t_pad=t_pad,
        inv_count=1.0 / count, eps=eps, normalize=normalize, relu=relu)

    # VMEM budget from actual block sizes (double-buffered in/out + f32 temps),
    # with headroom, capped below this generation's physical per-core capacity.
    in_b = jnp.dtype(compute_dtype).itemsize
    out_b = jnp.dtype(out_dtype).itemsize
    need = (2 * C_in * l_pad * in_b                    # x block (double-buffered)
            + 2 * C_out * t_pad * out_b                # out block (double-buffered)
            + 2 * C_out * t_pad * 4                    # f32 accumulator / temps
            + K * K * C_out * max(C_in, 128) * in_b    # weights (lane-padded)
            + t_pad * 4 + C_out * 2 * 128 * 4)         # mask + params
    try:
        vmem_cap = pltpu.get_tpu_info().vmem_capacity_bytes
    except Exception:
        vmem_cap = 64 * 1024 * 1024
    vmem_limit = int(min(int(0.75 * vmem_cap), max(32 * 1024 * 1024, 2 * need)))

    out_flat = pl.pallas_call(
        kernel,
        out_shape=jax.ShapeDtypeStruct((N, C_out, t_pad), out_dtype),
        grid_spec=pltpu.PrefetchScalarGridSpec(
            num_scalar_prefetch=0,
            grid=(N,),                                  # batch axis on the grid
            in_specs=[
                pl.BlockSpec((1, C_in, l_pad), lambda n: (n, 0, 0)),
                pl.BlockSpec((K * K, C_out, C_in), lambda n: (0, 0, 0)),
                pl.BlockSpec((C_out, 2), lambda n: (0, 0)),
                pl.BlockSpec((1, t_pad), lambda n: (0, 0)),
            ],
            out_specs=pl.BlockSpec((1, C_out, t_pad), lambda n: (n, 0, 0)),
        ),
        compiler_params=pltpu.CompilerParams(
            dimension_semantics=("parallel",),
            vmem_limit_bytes=vmem_limit),
    )(x_flat, w_taps, params, mask)

    # Drop padded-grid garbage columns; for stride > 1, subsample to the strided grid.
    out = out_flat[:, :, :t_valid].reshape(N, C_out, Ho1, Wp)
    out = out[:, :, ::stride, :Wo1:stride]
    return out


# -------------------------- pure-JAX reference -------------------------------

def conv_block_reference(x, weight, bias, gamma, beta, *,
                         kernel_size, stride=1, upsample=False,
                         normalize=True, relu=True, eps=1e-5):
    if upsample:
        x = jnp.repeat(jnp.repeat(x, 2, axis=2), 2, axis=3)
    pad = kernel_size // 2
    x = jnp.pad(x, ((0, 0), (0, 0), (pad, pad), (pad, pad)), mode="reflect")
    y = lax.conv_general_dilated(
        x, weight, window_strides=(stride, stride), padding="VALID",
        dimension_numbers=("NCHW", "OIHW", "NCHW"))
    y = y + bias[None, :, None, None]
    if normalize:
        mean = jnp.mean(y, axis=(2, 3), keepdims=True)
        var = jnp.mean((y - mean) ** 2, axis=(2, 3), keepdims=True)
        y = (y - mean) / jnp.sqrt(var + eps)
        y = y * gamma[None, :, None, None] + beta[None, :, None, None]
    if relu:
        y = jnp.maximum(y, 0.0)
    return y


# ----------------------------------- main ------------------------------------

if __name__ == "__main__":
    # ConvBlock(in_channels=4, out_channels=8, kernel_size=3, stride=1)
    N, C_in, H, W = 2, 4, 16, 16
    C_out, K = 8, 3

    key = jax.random.PRNGKey(0)
    kx, kw, kb, kg, kbe = jax.random.split(key, 5)
    x = jax.random.normal(kx, (N, C_in, H, W), dtype=jnp.float32)
    weight = jax.random.normal(kw, (C_out, C_in, K, K), dtype=jnp.float32) * 0.1
    bias = jax.random.normal(kb, (C_out,), dtype=jnp.float32) * 0.1
    gamma = 1.0 + 0.1 * jax.random.normal(kg, (C_out,), dtype=jnp.float32)
    beta = 0.1 * jax.random.normal(kbe, (C_out,), dtype=jnp.float32)

    ref = conv_block_reference(x, weight, bias, gamma, beta,
                               kernel_size=K, stride=1,
                               upsample=False, normalize=True, relu=True)

    # f32 compute path: tight tolerance.
    out_f32 = conv_block_forward(x, weight, bias, gamma, beta,
                                 kernel_size=K, stride=1,
                                 upsample=False, normalize=True, relu=True,
                                 compute_dtype=jnp.float32)
    out_f32 = jax.block_until_ready(out_f32)
    assert out_f32.shape == (N, C_out, H, W)
    assert float(jnp.max(jnp.abs(out_f32 - ref))) < 1e-3, "f32 mismatch vs reference"

    # bf16 fast path (default): inputs rounded to bf16, f32 accumulation/stats.
    out_bf16 = conv_block_forward(x, weight, bias, gamma, beta,
                                  kernel_size=K, stride=1,
                                  upsample=False, normalize=True, relu=True)
    out_bf16 = jax.block_until_ready(out_bf16)
    assert out_bf16.shape == (N, C_out, H, W)
    assert float(jnp.max(jnp.abs(out_bf16 - ref))) < 5e-2, "bf16 mismatch vs reference"

    # Upsample path (nearest 2x), f32 compute.
    x2 = jax.random.normal(kx, (N, C_in, 8, 8), dtype=jnp.float32)
    ref2 = conv_block_reference(x2, weight, bias, gamma, beta,
                                kernel_size=K, stride=1,
                                upsample=True, normalize=True, relu=True)
    out2 = conv_block_forward(x2, weight, bias, gamma, beta,
                              kernel_size=K, stride=1,
                              upsample=True, normalize=True, relu=True,
                              compute_dtype=jnp.float32)
    out2 = jax.block_until_ready(out2)
    assert out2.shape == (N, C_out, 16, 16)
    assert float(jnp.max(jnp.abs(out2 - ref2))) < 1e-3, "upsample mismatch vs reference"

    # Strided (downsampling) path, f32 compute.
    ref3 = conv_block_reference(x, weight, bias, gamma, beta,
                                kernel_size=K, stride=2,
                                upsample=False, normalize=True, relu=True)
    out3 = conv_block_forward(x, weight, bias, gamma, beta,
                              kernel_size=K, stride=2,
                              upsample=False, normalize=True, relu=True,
                              compute_dtype=jnp.float32)
    out3 = jax.block_until_ready(out3)
    assert out3.shape == ref3.shape
    assert float(jnp.max(jnp.abs(out3 - ref3))) < 1e-3, "stride-2 mismatch vs reference"

    print("KERNEL_OK")
</pallas_src>

<mosaic_0001>
module attributes {stable_mosaic.version = 11 : i64} {
  func.func @_convblock_kernel(%arg0: i32, %arg1: memref<1x4x512xf32, #tpu.memory_space<vmem>>, %arg2: memref<9x8x4xf32, #tpu.memory_space<vmem>>, %arg3: memref<8x2xf32, #tpu.memory_space<vmem>>, %arg4: memref<1x384xf32, #tpu.memory_space<vmem>>, %arg5: memref<1x8x384xf32, #tpu.memory_space<vmem>>) attributes {dimension_semantics = [#tpu.dimension_semantics<parallel>], iteration_bounds = array<i64: 2>, scalar_prefetch = 0 : i64, scratch_operands = 0 : i64, tpu.core_type = #tpu.core_type<tc>, window_params = [{transform_indices = @transform_0, window_bounds = array<i64: 1, 4, 512>}, {pipeline_mode = #tpu.pipeline_mode<synchronous>, transform_indices = @transform_1, window_bounds = array<i64: 9, 8, 4>}, {pipeline_mode = #tpu.pipeline_mode<synchronous>, transform_indices = @transform_2, window_bounds = array<i64: 8, 2>}, {pipeline_mode = #tpu.pipeline_mode<synchronous>, transform_indices = @transform_3, window_bounds = array<i64: 1, 384>}, {transform_indices = @transform_4, window_bounds = array<i64: 1, 8, 384>}]} {
    %c0 = arith.constant 0 : index
    %c0_0 = arith.constant 0 : index
    %c0_1 = arith.constant 0 : index
    %0 = vector.load %arg1[%c0, %c0_0, %c0_1] : memref<1x4x512xf32, #tpu.memory_space<vmem>>, vector<1x4x512xf32>
    %1 = vector.shape_cast %0 : vector<1x4x512xf32> to vector<4x512xf32>
    %c0_2 = arith.constant 0 : index
    %c0_3 = arith.constant 0 : index
    %c0_4 = arith.constant 0 : index
    %2 = vector.load %arg2[%c0_2, %c0_3, %c0_4] : memref<9x8x4xf32, #tpu.memory_space<vmem>>, vector<1x8x4xf32>
    %3 = vector.shape_cast %2 : vector<1x8x4xf32> to vector<8x4xf32>
    %4 = vector.extract_strided_slice %1 {offsets = [0, 0], sizes = [4, 384], strides = [1, 1]} : vector<4x512xf32> to vector<4x384xf32>
    %cst = arith.constant dense<0.000000e+00> : vector<8x384xf32>
    %5 = tpu.matmul %3, %4, %cst {dimension_numbers = #tpu.dot_dimension_numbers<[1], [0], [0], [1], [0, 0, 1, 1], [], []>} : vector<8x4xf32>, vector<4x384xf32>, vector<8x384xf32> -> vector<8x384xf32>
    %c1 = arith.constant 1 : index
    %c0_5 = arith.constant 0 : index
    %c0_6 = arith.constant 0 : index
    %6 = vector.load %arg2[%c1, %c0_5, %c0_6] : memref<9x8x4xf32, #tpu.memory_space<vmem>>, vector<1x8x4xf32>
    %7 = vector.shape_cast %6 : vector<1x8x4xf32> to vector<8x4xf32>
    %8 = vector.extract_strided_slice %1 {offsets = [0, 1], sizes = [4, 384], strides = [1, 1]} : vector<4x512xf32> to vector<4x384xf32>
    %cst_7 = arith.constant dense<0.000000e+00> : vector<8x384xf32>
    %9 = tpu.matmul %7, %8, %cst_7 {dimension_numbers = #tpu.dot_dimension_numbers<[1], [0], [0], [1], [0, 0, 1, 1], [], []>} : vector<8x4xf32>, vector<4x384xf32>, vector<8x384xf32> -> vector<8x384xf32>
    %10 = arith.addf %5, %9 : vector<8x384xf32>
    %c2 = arith.constant 2 : index
    %c0_8 = arith.constant 0 : index
    %c0_9 = arith.constant 0 : index
    %11 = vector.load %arg2[%c2, %c0_8, %c0_9] : memref<9x8x4xf32, #tpu.memory_space<vmem>>, vector<1x8x4xf32>
    %12 = vector.shape_cast %11 : vector<1x8x4xf32> to vector<8x4xf32>
    %13 = vector.extract_strided_slice %1 {offsets = [0, 2], sizes = [4, 384], strides = [1, 1]} : vector<4x512xf32> to vector<4x384xf32>
    %cst_10 = arith.constant dense<0.000000e+00> : vector<8x384xf32>
    %14 = tpu.matmul %12, %13, %cst_10 {dimension_numbers = #tpu.dot_dimension_numbers<[1], [0], [0], [1], [0, 0, 1, 1], [], []>} : vector<8x4xf32>, vector<4x384xf32>, vector<8x384xf32> -> vector<8x384xf32>
    %15 = arith.addf %10, %14 : vector<8x384xf32>
    %c3 = arith.constant 3 : index
    %c0_11 = arith.constant 0 : index
    %c0_12 = arith.constant 0 : index
    %16 = vector.load %arg2[%c3, %c0_11, %c0_12] : memref<9x8x4xf32, #tpu.memory_space<vmem>>, vector<1x8x4xf32>
    %17 = vector.shape_cast %16 : vector<1x8x4xf32> to vector<8x4xf32>
    %18 = vector.extract_strided_slice %1 {offsets = [0, 18], sizes = [4, 384], strides = [1, 1]} : vector<4x512xf32> to vector<4x384xf32>
    %cst_13 = arith.constant dense<0.000000e+00> : vector<8x384xf32>
    %19 = tpu.matmul %17, %18, %cst_13 {dimension_numbers = #tpu.dot_dimension_numbers<[1], [0], [0], [1], [0, 0, 1, 1], [], []>} : vector<8x4xf32>, vector<4x384xf32>, vector<8x384xf32> -> vector<8x384xf32>
    %20 = arith.addf %15, %19 : vector<8x384xf32>
    %c4 = arith.constant 4 : index
    %c0_14 = arith.constant 0 : index
    %c0_15 = arith.constant 0 : index
    %21 = vector.load %arg2[%c4, %c0_14, %c0_15] : memref<9x8x4xf32, #tpu.memory_space<vmem>>, vector<1x8x4xf32>
    %22 = vector.shape_cast %21 : vector<1x8x4xf32> to vector<8x4xf32>
    %23 = vector.extract_strided_slice %1 {offsets = [0, 19], sizes = [4, 384], strides = [1, 1]} : vector<4x512xf32> to vector<4x384xf32>
    %cst_16 = arith.constant dense<0.000000e+00> : vector<8x384xf32>
    %24 = tpu.matmul %22, %23, %cst_16 {dimension_numbers = #tpu.dot_dimension_numbers<[1], [0], [0], [1], [0, 0, 1, 1], [], []>} : vector<8x4xf32>, vector<4x384xf32>, vector<8x384xf32> -> vector<8x384xf32>
    %25 = arith.addf %20, %24 : vector<8x384xf32>
    %c5 = arith.constant 5 : index
    %c0_17 = arith.constant 0 : index
    %c0_18 = arith.constant 0 : index
    %26 = vector.load %arg2[%c5, %c0_17, %c0_18] : memref<9x8x4xf32, #tpu.memory_space<vmem>>, vector<1x8x4xf32>
    %27 = vector.shape_cast %26 : vector<1x8x4xf32> to vector<8x4xf32>
    %28 = vector.extract_strided_slice %1 {offsets = [0, 20], sizes = [4, 384], strides = [1, 1]} : vector<4x512xf32> to vector<4x384xf32>
    %cst_19 = arith.constant dense<0.000000e+00> : vector<8x384xf32>
    %29 = tpu.matmul %27, %28, %cst_19 {dimension_numbers = #tpu.dot_dimension_numbers<[1], [0], [0], [1], [0, 0, 1, 1], [], []>} : vector<8x4xf32>, vector<4x384xf32>, vector<8x384xf32> -> vector<8x384xf32>
    %30 = arith.addf %25, %29 : vector<8x384xf32>
    %c6 = arith.constant 6 : index
    %c0_20 = arith.constant 0 : index
    %c0_21 = arith.constant 0 : index
    %31 = vector.load %arg2[%c6, %c0_20, %c0_21] : memref<9x8x4xf32, #tpu.memory_space<vmem>>, vector<1x8x4xf32>
    %32 = vector.shape_cast %31 : vector<1x8x4xf32> to vector<8x4xf32>
    %33 = vector.extract_strided_slice %1 {offsets = [0, 36], sizes = [4, 384], strides = [1, 1]} : vector<4x512xf32> to vector<4x384xf32>
    %cst_22 = arith.constant dense<0.000000e+00> : vector<8x384xf32>
    %34 = tpu.matmul %32, %33, %cst_22 {dimension_numbers = #tpu.dot_dimension_numbers<[1], [0], [0], [1], [0, 0, 1, 1], [], []>} : vector<8x4xf32>, vector<4x384xf32>, vector<8x384xf32> -> vector<8x384xf32>
    %35 = arith.addf %30, %34 : vector<8x384xf32>
    %c7 = arith.constant 7 : index
    %c0_23 = arith.constant 0 : index
    %c0_24 = arith.constant 0 : index
    %36 = vector.load %arg2[%c7, %c0_23, %c0_24] : memref<9x8x4xf32, #tpu.memory_space<vmem>>, vector<1x8x4xf32>
    %37 = vector.shape_cast %36 : vector<1x8x4xf32> to vector<8x4xf32>
    %38 = vector.extract_strided_slice %1 {offsets = [0, 37], sizes = [4, 384], strides = [1, 1]} : vector<4x512xf32> to vector<4x384xf32>
    %cst_25 = arith.constant dense<0.000000e+00> : vector<8x384xf32>
    %39 = tpu.matmul %37, %38, %cst_25 {dimension_numbers = #tpu.dot_dimension_numbers<[1], [0], [0], [1], [0, 0, 1, 1], [], []>} : vector<8x4xf32>, vector<4x384xf32>, vector<8x384xf32> -> vector<8x384xf32>
    %40 = arith.addf %35, %39 : vector<8x384xf32>
    %c8 = arith.constant 8 : index
    %c0_26 = arith.constant 0 : index
    %c0_27 = arith.constant 0 : index
    %41 = vector.load %arg2[%c8, %c0_26, %c0_27] : memref<9x8x4xf32, #tpu.memory_space<vmem>>, vector<1x8x4xf32>
    %42 = vector.shape_cast %41 : vector<1x8x4xf32> to vector<8x4xf32>
    %43 = vector.extract_strided_slice %1 {offsets = [0, 38], sizes = [4, 384], strides = [1, 1]} : vector<4x512xf32> to vector<4x384xf32>
    %cst_28 = arith.constant dense<0.000000e+00> : vector<8x384xf32>
    %44 = tpu.matmul %42, %43, %cst_28 {dimension_numbers = #tpu.dot_dimension_numbers<[1], [0], [0], [1], [0, 0, 1, 1], [], []>} : vector<8x4xf32>, vector<4x384xf32>, vector<8x384xf32> -> vector<8x384xf32>
    %45 = arith.addf %40, %44 : vector<8x384xf32>
    %c0_29 = arith.constant 0 : index
    %c0_30 = arith.constant 0 : index
    %46 = vector.load %arg4[%c0_29, %c0_30] : memref<1x384xf32, #tpu.memory_space<vmem>>, vector<1x384xf32>
    %47 = vector.broadcast %46 : vector<1x384xf32> to vector<8x384xf32>
    %48 = arith.mulf %45, %47 : vector<8x384xf32>
    %cst_31 = arith.constant dense<0.000000e+00> : vector<8xf32>
    %49 = vector.multi_reduction <add>, %48, %cst_31 [1] : vector<8x384xf32> to vector<8xf32>
    %50 = vector.shape_cast %49 : vector<8xf32> to vector<8x1xf32>
    %51 = arith.mulf %48, %48 : vector<8x384xf32>
    %cst_32 = arith.constant dense<0.000000e+00> : vector<8xf32>
    %52 = vector.multi_reduction <add>, %51, %cst_32 [1] : vector<8x384xf32> to vector<8xf32>
    %53 = vector.shape_cast %52 : vector<8xf32> to vector<8x1xf32>
    %cst_33 = arith.constant 3.906250e-03 : f32
    %54 = vector.broadcast %cst_33 : f32 to vector<8x1xf32>
    %55 = arith.mulf %50, %54 : vector<8x1xf32>
    %cst_34 = arith.constant 3.906250e-03 : f32
    %56 = vector.broadcast %cst_34 : f32 to vector<8x1xf32>
    %57 = arith.mulf %53, %56 : vector<8x1xf32>
    %58 = arith.mulf %55, %55 : vector<8x1xf32>
    %59 = arith.subf %57, %58 : vector<8x1xf32>
    %cst_35 = arith.constant 0.000000e+00 : f32
    %60 = vector.broadcast %cst_35 : f32 to vector<8x1xf32>
    %61 = arith.maximumf %59, %60 : vector<8x1xf32>
    %c0_36 = arith.constant 0 : index
    %c0_37 = arith.constant 0 : index
    %62 = vector.load %arg3[%c0_36, %c0_37] : memref<8x2xf32, #tpu.memory_space<vmem>>, vector<8x1xf32>
    %cst_38 = arith.constant 9.99999974E-6 : f32
    %63 = vector.broadcast %cst_38 : f32 to vector<8x1xf32>
    %64 = arith.addf %61, %63 : vector<8x1xf32>
    %65 = math.rsqrt %64 : vector<8x1xf32>
    %66 = arith.mulf %62, %65 : vector<8x1xf32>
    %67 = vector.broadcast %66 : vector<8x1xf32> to vector<8x384xf32>
    %68 = arith.mulf %45, %67 : vector<8x384xf32>
    %c0_39 = arith.constant 0 : index
    %c1_40 = arith.constant 1 : index
    %69 = vector.load %arg3[%c0_39, %c1_40] : memref<8x2xf32, #tpu.memory_space<vmem>>, vector<8x1xf32>
    %70 = arith.mulf %55, %66 : vector<8x1xf32>
    %71 = arith.subf %69, %70 : vector<8x1xf32>
    %72 = vector.broadcast %71 : vector<8x1xf32> to vector<8x384xf32>
    %73 = arith.addf %68, %72 : vector<8x384xf32>
    %cst_41 = arith.constant 0.000000e+00 : f32
    %74 = vector.broadcast %cst_41 : f32 to vector<8x384xf32>
    %75 = arith.maximumf %73, %74 : vector<8x384xf32>
    %c0_42 = arith.constant 0 : index
    %c0_43 = arith.constant 0 : index
    %c0_44 = arith.constant 0 : index
    %76 = vector.load %arg5[%c0_42, %c0_43, %c0_44] : memref<1x8x384xf32, #tpu.memory_space<vmem>>, vector<1x8x384xf32>
    %77 = vector.shape_cast %76 : vector<1x8x384xf32> to vector<8x384xf32>
    %78 = vector.shape_cast %75 : vector<8x384xf32> to vector<1x8x384xf32>
    tpu.vector_store %arg5[%c0_42, %c0_43, %c0_44], %78 {strides = array<i32>} : memref<1x8x384xf32, #tpu.memory_space<vmem>>, vector<1x8x384xf32>,
    return
  }
  func.func @transform_0(%arg0: i32) -> (i32, i32, i32) {
    %c0_i32 = arith.constant 0 : i32
    %c0_i32_0 = arith.constant 0 : i32
    %c0_i32_1 = arith.constant 0 : i32
    return %arg0, %c0_i32, %c0_i32_0 : i32, i32, i32
  }
  func.func @transform_1(%arg0: i32) -> (i32, i32, i32) {
    %c0_i32 = arith.constant 0 : i32
    %c0_i32_0 = arith.constant 0 : i32
    %c0_i32_1 = arith.constant 0 : i32
    %c0_i32_2 = arith.constant 0 : i32
    return %c0_i32, %c0_i32_0, %c0_i32_1 : i32, i32, i32
  }
  func.func @transform_2(%arg0: i32) -> (i32, i32) {
    %c0_i32 = arith.constant 0 : i32
    %c0_i32_0 = arith.constant 0 : i32
    %c0_i32_1 = arith.constant 0 : i32
    return %c0_i32, %c0_i32_0 : i32, i32
  }
  func.func @transform_3(%arg0: i32) -> (i32, i32) {
    %c0_i32 = arith.constant 0 : i32
    %c0_i32_0 = arith.constant 0 : i32
    %c0_i32_1 = arith.constant 0 : i32
    return %c0_i32, %c0_i32_0 : i32, i32
  }
  func.func @transform_4(%arg0: i32) -> (i32, i32, i32) {
    %c0_i32 = arith.constant 0 : i32
    %c0_i32_0 = arith.constant 0 : i32
    %c0_i32_1 = arith.constant 0 : i32
    return %arg0, %c0_i32, %c0_i32_0 : i32, i32, i32
  }
}

</mosaic_0001>

<llo_original>
// kernel: tpu_custom_call.1
$region0: #{tpu_custom_call.1}
  #allocation0 [shape = 'u32[]', space=smem, size = 0x4, offset = 0x4, fixed_abs, tag = 'smem constant byte address 0x4 - core index']
  #allocation1 [shape = 'u32[144,128]{1,0:T(1,128)}', space=vmem, size = 0x12000, scoped, tag = 'internal scratch']
  %s0 = inlined_call_operand.vmem [shape: f32[2,4,512], index: 0, kind: input, shape index: {}]
  %s1 = inlined_call_operand.vmem [shape: f32[9,8,4], index: 1, kind: input, shape index: {}]
  %s2 = inlined_call_operand.vmem [shape: f32[8,2], index: 2, kind: input, shape index: {}]
  %s3 = inlined_call_operand.vmem [shape: f32[1,384], index: 3, kind: input, shape index: {}]
  %s4 = inlined_call_operand.hbm [shape: f32[2,8,384], index: 4, kind: output, shape index: {}]
  %s5 = sld [smem:[#allocation0]]
  $region49: #{tpu_custom_call.1} parent=0
    _
  %s7 = ssub.s32 1, %s5
  %s8 = scalar_select 0, %s7, %s5
  $region1: #{tpu_custom_call.1} parent=0
    #allocation2 [shape = 'u8[24576]{0}', space=vmem, size = 0x6000, scoped, tag = 'output window, operand 0']
    #allocation3 [shape = 's32[2]{0}', space=sflag, size = 0x8, scoped, tag = 'scoped memory for tpu_custom_call.1']
    %9 = vsyncpa [#allocation3], 0
    %s10 = scalar_lea.sflag [#allocation3], 1
    %11 = vsyncpa %s10, 0
    loop: start=0, step=1, limit=4
    $region2: #{tpu_custom_call.1} parent=1 // loop_pre_header
      _
    $region3: #{tpu_custom_call.1} parent=1 // loop_header
      %s13 = sphi 0, %s17
      %p14 = scmp.ge.s32.totalorder %s13, 4
      %s23 = sphi 0, %s25
      %s26 = sphi 0, %s23
      %s27 = sphi 0, %s26
      %s43 = sphi 0, %s27
      %s47 = sphi 0, %s47
      %s49 = sphi 0, %s47
      %s50 = sphi 0, %s49
      %s64 = sphi 0, %s50
      %s68 = sphi 0, %s68
      %s70 = sphi 0, %s68
      %s71 = sphi 0, %s70
      %s85 = sphi 0, %s71
      %s89 = sphi 0, %s89
      %s91 = sphi 0, %s89
      %s92 = sphi 0, %s91
      %s106 = sphi 0, %s92
      %s112 = sphi 0, %s114
      %s115 = sphi 0, %s112
      %s116 = sphi 0, %s115
      %s132 = sphi 0, %s116
    $region4: #{tpu_custom_call.1} parent=1 // loop_header_branch
      %16 = sbr.rel (%p14) target = $region8
    $region5: #{tpu_custom_call.1} parent=1 // loop_body
      %s18 = ssub.s32 %s13, 1
      %s19 = ssub.s32 %s13, 2
      %s20 = sadd.s32 %s13, 1
      %s21 = ssub.s32 %s13, %s20
      %p22 = scmp.eq.s32.totalorder %s21, 0
      %s24 = sadd.s32 %s23, 1
      %s25 = scalar_select %p22, %s23, %s24
      %p28 = pneg %p22
      %p29 = scmp.eq.s32.totalorder %s13, 1
      %p30 = por %p28, %p29
      %p31 = scmp.ne.s32.totalorder %s23, %s26
      %p32 = scmp.eq.s32.totalorder %s13, 0
      %p33 = por %p31, %p32
      %p34 = scmp.ne.s32.totalorder %s23, %s26
      %p35 = scmp.eq.s32.totalorder %s18, 1
      %p36 = por %p34, %p35
      %p37 = scmp.ne.s32.totalorder %s26, %s27
      %p38 = scmp.eq.s32.totalorder %s18, 0
      %p39 = por %p37, %p38
      %p40 = scmp.ne.s32.totalorder %s26, %s27
      %p41 = scmp.eq.s32.totalorder %s19, 1
      %p42 = por %p40, %p41
      %p44 = scmp.ne.s32.totalorder %s27, %s43
      %p45 = scmp.eq.s32.totalorder %s19, 0
      %p46 = por %p44, %p45
      %s48 = sadd.s32 %s47, 1
      %p51 = scmp.eq.s32.totalorder %s13, 1
      %p52 = scmp.ne.s32.totalorder %s47, %s49
      %p53 = scmp.eq.s32.totalorder %s13, 0
      %p54 = por %p52, %p53
      %p55 = scmp.ne.s32.totalorder %s47, %s49
      %p56 = scmp.eq.s32.totalorder %s18, 1
      %p57 = por %p55, %p56
      %p58 = scmp.ne.s32.totalorder %s49, %s50
      %p59 = scmp.eq.s32.totalorder %s18, 0
      %p60 = por %p58, %p59
      %p61 = scmp.ne.s32.totalorder %s49, %s50
      %p62 = scmp.eq.s32.totalorder %s19, 1
      %p63 = por %p61, %p62
      %p65 = scmp.ne.s32.totalorder %s50, %s64
      %p66 = scmp.eq.s32.totalorder %s19, 0
      %p67 = por %p65, %p66
      %s69 = sadd.s32 %s68, 1
      %p72 = scmp.eq.s32.totalorder %s13, 1
      %p73 = scmp.ne.s32.totalorder %s68, %s70
      %p74 = scmp.eq.s32.totalorder %s13, 0
      %p75 = por %p73, %p74
      %p76 = scmp.ne.s32.totalorder %s68, %s70
      %p77 = scmp.eq.s32.totalorder %s18, 1
      %p78 = por %p76, %p77
      %p79 = scmp.ne.s32.totalorder %s70, %s71
      %p80 = scmp.eq.s32.totalorder %s18, 0
      %p81 = por %p79, %p80
      %p82 = scmp.ne.s32.totalorder %s70, %s71
      %p83 = scmp.eq.s32.totalorder %s19, 1
      %p84 = por %p82, %p83
      %p86 = scmp.ne.s32.totalorder %s71, %s85
      %p87 = scmp.eq.s32.totalorder %s19, 0
      %p88 = por %p86, %p87
      %s90 = sadd.s32 %s89, 1
      %p93 = scmp.eq.s32.totalorder %s13, 1
      %p94 = scmp.ne.s32.totalorder %s89, %s91
      %p95 = scmp.eq.s32.totalorder %s13, 0
      %p96 = por %p94, %p95
      %p97 = scmp.ne.s32.totalorder %s89, %s91
      %p98 = scmp.eq.s32.totalorder %s18, 1
      %p99 = por %p97, %p98
      %p100 = scmp.ne.s32.totalorder %s91, %s92
      %p101 = scmp.eq.s32.totalorder %s18, 0
      %p102 = por %p100, %p101
      %p103 = scmp.ne.s32.totalorder %s91, %s92
      %p104 = scmp.eq.s32.totalorder %s19, 1
      %p105 = por %p103, %p104
      %p107 = scmp.ne.s32.totalorder %s92, %s106
      %p108 = scmp.eq.s32.totalorder %s19, 0
      %p109 = por %p107, %p108
      %s110 = ssub.s32 %s13, %s20
      %p111 = scmp.eq.s32.totalorder %s110, 0
      %s113 = sadd.s32 %s112, 1
      %s114 = scalar_select %p111, %s112, %s113
      %p117 = pneg %p111
      %p118 = scmp.eq.s32.totalorder %s13, 1
      %p119 = por %p117, %p118
      %p120 = scmp.ne.s32.totalorder %s112, %s115
      %p121 = scmp.eq.s32.totalorder %s13, 0
      %p122 = por %p120, %p121
      %p123 = scmp.ne.s32.totalorder %s112, %s115
      %p124 = scmp.eq.s32.totalorder %s18, 1
      %p125 = por %p123, %p124
      %p126 = scmp.ne.s32.totalorder %s115, %s116
      %p127 = scmp.eq.s32.totalorder %s18, 0
      %p128 = por %p126, %p127
      %p129 = scmp.ne.s32.totalorder %s115, %s116
      %p130 = scmp.eq.s32.totalorder %s19, 1
      %p131 = por %p129, %p130
      %p133 = scmp.ne.s32.totalorder %s116, %s132
      %p134 = scmp.eq.s32.totalorder %s19, 0
      %p135 = por %p133, %p134
      %p136 = scmp.le.s32.totalorder 1, %s13
      %p137 = scmp.lt.s32.totalorder %s13, 3
      %p138 = pnand %p136, %p137
      %p139 = pneg %p138
      // Predicated region
      $region9: #{tpu_custom_call.1} parent=5 // pred_check
        _
      $region10: #{tpu_custom_call.1} parent=5 // pred_check_branch
        %141 = sbr.rel (%p138) target = $region12
      $region11: #{tpu_custom_call.1} parent=5 // pred_region
        %s142 = ssub.s32 %s13, 1
        // Predicated region
        $region13: #{tpu_custom_call.1} parent=11 // pred_check
          %p143 = pneg %p60
        $region14: #{tpu_custom_call.1} parent=11 // pred_check_branch
          %145 = sbr.rel (%p143) target = $region16
        $region15: #{tpu_custom_call.1} parent=11 // pred_region
          _
        $region16: #{tpu_custom_call.1} parent=11 // pred_fallthru
          _
        // Predicated region
        $region17: #{tpu_custom_call.1} parent=11 // pred_check
          %p146 = pneg %p81
        $region18: #{tpu_custom_call.1} parent=11 // pred_check_branch
          %148 = sbr.rel (%p146) target = $region20
        $region19: #{tpu_custom_call.1} parent=11 // pred_region
          _
        $region20: #{tpu_custom_call.1} parent=11 // pred_fallthru
          _
        // Predicated region
        $region21: #{tpu_custom_call.1} parent=11 // pred_check
          %p149 = pneg %p102
        $region22: #{tpu_custom_call.1} parent=11 // pred_check_branch
          %151 = sbr.rel (%p149) target = $region24
        $region23: #{tpu_custom_call.1} parent=11 // pred_region
          _
        $region24: #{tpu_custom_call.1} parent=11 // pred_fallthru
          _
      $region12: #{tpu_custom_call.1} parent=5 // pred_fallthru
        _
      %p152 = scmp.lt.s32.totalorder %s13, 2
      // Predicated region
      $region25: #{tpu_custom_call.1} parent=5 // pred_check
        %p153 = pneg %p152
      $region26: #{tpu_custom_call.1} parent=5 // pred_check_branch
        %155 = sbr.rel (%p153) target = $region28
      $region27: #{tpu_custom_call.1} parent=5 // pred_region
        // Predicated region
        $region29: #{tpu_custom_call.1} parent=27 // pred_check
          %p156 = pneg %p33
        $region30: #{tpu_custom_call.1} parent=27 // pred_check_branch
          %158 = sbr.rel (%p156) target = $region32
        $region31: #{tpu_custom_call.1} parent=27 // pred_region
          %p159 = scmp.lt.s32.totalorder %s13, 1
          %s160 = scalar_select %p159, %s13, 1
          %s161 = smul.addr %s160, 4
          %s162 = smul.addr %s161, 4
          %s163 = scalar_lea.vmem %s0, %s162
        $region32: #{tpu_custom_call.1} parent=27 // pred_fallthru
          _
      $region28: #{tpu_custom_call.1} parent=5 // pred_fallthru
        _
      %p164 = scmp.le.s32.totalorder 1, %s13
      %p165 = scmp.lt.s32.totalorder %s13, 3
      %p166 = pnand %p164, %p165
      %p167 = pneg %p166
      // Predicated region
      $region33: #{tpu_custom_call.1} parent=5 // pred_check
        _
      $region34: #{tpu_custom_call.1} parent=5 // pred_check_branch
        %169 = sbr.rel (%p166) target = $region36
      $region35: #{tpu_custom_call.1} parent=5 // pred_region
        %s170 = ssub.s32 %s13, 1
        %p171 = scmp.lt.s32.totalorder %s18, 1
        %s172 = scalar_select %p171, %s18, 1
        %s173 = smul.addr %s172, 4
        %s174 = smul.addr %s173, 4
        %s175 = scalar_lea.vmem %s0, %s174
        %p176 = pneg %p39
        %p177 = pneg %p36
        %p178 = pneg %p60
        %p179 = pneg %p57
        %p180 = pneg %p81
        %p181 = pneg %p78
        %p182 = pneg %p102
        %p183 = pneg %p99
        %p184 = pneg %p128
        %p185 = pneg %p125
        %s186 = sand.u32 %s115, 1
        %s187 = scalar_lea.sflag [#allocation3], %s186
        %s188 = sand.u32 %s115, 1
        %s189 = smul.addr %s188, 24
        %s190 = scalar_lea.vmem [#allocation2], %s189
        %p191 = scmp.lt.s32.totalorder %s18, 1
        %s192 = scalar_select %p191, %s18, 1
        %s193 = smul.addr %s192, 4
        %s194 = smul.addr %s193, 4
        %s195 = scalar_lea.vmem %s0, %s194
        %v196 = vld [vmem:[%s195] sm:$0xff]
        %v197 = vld [vmem:[%s195 + $0x8] sm:$0xff]
        %v198 = vld [vmem:[%s1] sm:$0xff]
        %s199 = scalar_lea.vmem %s1, 8
        %v200 = vld [vmem:[%s199] sm:$0xff]
        %v203 = vcombine.high %v196, %v196
        %v204 = vcombine.high %v197, %v197
        %205 = vrot.lane.b32.xlu0 %v196, 127
        %v206 = vpop.permute.xlu0 %205
        %207 = vrot.lane.b32.xlu0 %v203, 127
        %v208 = vpop.permute.xlu0 %207
        %209 = vrot.lane.b32.xlu0 %v197, 127
        %v210 = vpop.permute.xlu0 %209
        %211 = vrot.lane.b32.xlu0 %v204, 127
        %v212 = vpop.permute.xlu0 %211
        %vm213 = vcmask 1039360
        %v214 = vsel %vm213, %v206, %v208
        %v215 = vsel %vm213, %v208, %v210
        %v216 = vsel %vm213, %v210, %v212
        %vm217 = vcmask 31744
        %v219 = vsel %vm217, %v200, 0
        %vm221 = vcmask 1043456
        %v222 = vsel %vm221, %v214, 0
        %v224 = vsel %vm221, %v215, 0
        %v226 = vsel %vm221, %v216, 0
        %228 = vmatprep.subr.mxu0 %v224
        %229 = vmatpush1.msra.mxu0 %v222
        %230 = vmatprep.subr.mxu0 0.0
        %231 = vmatpush1.msra.mxu0 0.0
        %232 = vmatprep.subr.mxu0 0.0
        %233 = vmatpush1.msra.mxu0 0.0
        %234 = vmatprep.subr.mxu0 0.0
        %235 = vmatpush1.msra.mxu0 0.0
        %236 = vmatprep.subr.mxu0 0.0
        %237 = vmatpush1.msra.mxu0 0.0
        %238 = vmatprep.subr.mxu0 0.0
        %239 = vmatpush1.msra.mxu0 0.0
        %240 = vmatprep.subr.mxu0 0.0
        %241 = vmatpush1.msra.mxu0 0.0
        %242 = vmatprep.subr.mxu0 0.0
        %243 = vmatpush1.msra.mxu0 0.0
        %244 = vmatprep.subr.mxu0 0.0
        %245 = vmatpush1.msra.mxu0 0.0
        %246 = vmatprep.subr.mxu0 0.0
        %247 = vmatpush1.msra.mxu0 0.0
        %248 = vmatprep.subr.mxu0 0.0
        %249 = vmatpush1.msra.mxu0 0.0
        %250 = vmatprep.subr.mxu0 0.0
        %251 = vmatpush1.msra.mxu0 0.0
        %252 = vmatprep.subr.mxu0 0.0
        %253 = vmatpush1.msra.mxu0 0.0
        %254 = vmatprep.subr.mxu0 0.0
        %255 = vmatpush1.msra.mxu0 0.0
        %256 = vmatprep.subr.mxu0 0.0
        %257 = vmatpush1.msra.mxu0 0.0
        %258 = vmatprep.subr.mxu0 0.0
        %259 = vmatpush1.msra.mxu0 0.0
        %260 = vmatprep.subr.mxu0 0.0
        %261 = vmatpush1.msra.mxu0 0.0
        %262 = vmatprep.subr.mxu0 0.0
        %263 = vmatpush1.msra.mxu0 0.0
        %264 = vmatprep.subr.mxu0 0.0
        %265 = vmatpush1.msra.mxu0 0.0
        %266 = vmatprep.subr.mxu0 0.0
        %267 = vmatpush1.msra.mxu0 0.0
        %268 = vmatprep.subr.mxu0 0.0
        %269 = vmatpush1.msra.mxu0 0.0
        %270 = vmatprep.subr.mxu0 0.0
        %271 = vmatpush1.msra.mxu0 0.0
        %272 = vmatprep.subr.mxu0 0.0
        %273 = vmatpush1.msra.mxu0 0.0
        %274 = vmatprep.subr.mxu0 0.0
        %275 = vmatpush1.msra.mxu0 0.0
        %276 = vmatprep.subr.mxu0 0.0
        %277 = vmatpush1.msra.mxu0 0.0
        %278 = vmatprep.subr.mxu0 0.0
        %279 = vmatpush1.msra.mxu0 0.0
        %280 = vmatprep.subr.mxu0 0.0
        %281 = vmatpush1.msra.mxu0 0.0
        %282 = vmatprep.subr.mxu0 0.0
        %283 = vmatpush1.msra.mxu0 0.0
        %284 = vmatprep.subr.mxu0 0.0
        %285 = vmatpush1.msra.mxu0 0.0
        %286 = vmatprep.subr.mxu0 0.0
        %287 = vmatpush1.msra.mxu0 0.0
        %288 = vmatprep.subr.mxu0 0.0
        %289 = vmatpush1.msra.mxu0 0.0
        %290 = vmatprep.subr.mxu0 0.0
        %291 = vmatpush1.msra.mxu0 0.0
        %292 = vmatprep.mubr.f32.mxu0 0.0
        %293 = vmatmul.mubr.f32.gmra.mrb[0].mxu0 %v219
        %v294 = vpop.f32.mrb[0].mxu0
        %v295 = vadd.f32 0.0, %v294
        %v296 = vpop.f32.mrb[0].mxu0
        %v297 = vadd.f32 0.0, %v296
        %298 = vdwg.mxu0
        %299 = vmatprep.subr.mxu0 0.0
        %300 = vmatpush1.msra.mxu0 %v226
        %301 = vmatprep.subr.mxu0 0.0
        %302 = vmatpush1.msra.mxu0 0.0
        %303 = vmatprep.subr.mxu0 0.0
        %304 = vmatpush1.msra.mxu0 0.0
        %305 = vmatprep.subr.mxu0 0.0
        %306 = vmatpush1.msra.mxu0 0.0
        %307 = vmatprep.subr.mxu0 0.0
        %308 = vmatpush1.msra.mxu0 0.0
        %309 = vmatprep.subr.mxu0 0.0
        %310 = vmatpush1.msra.mxu0 0.0
        %311 = vmatprep.subr.mxu0 0.0
        %312 = vmatpush1.msra.mxu0 0.0
        %313 = vmatprep.subr.mxu0 0.0
        %314 = vmatpush1.msra.mxu0 0.0
        %315 = vmatprep.subr.mxu0 0.0
        %316 = vmatpush1.msra.mxu0 0.0
        %317 = vmatprep.subr.mxu0 0.0
        %318 = vmatpush1.msra.mxu0 0.0
        %319 = vmatprep.subr.mxu0 0.0
        %320 = vmatpush1.msra.mxu0 0.0
        %321 = vmatprep.subr.mxu0 0.0
        %322 = vmatpush1.msra.mxu0 0.0
        %323 = vmatprep.subr.mxu0 0.0
        %324 = vmatpush1.msra.mxu0 0.0
        %325 = vmatprep.subr.mxu0 0.0
        %326 = vmatpush1.msra.mxu0 0.0
        %327 = vmatprep.subr.mxu0 0.0
        %328 = vmatpush1.msra.mxu0 0.0
        %329 = vmatprep.subr.mxu0 0.0
        %330 = vmatpush1.msra.mxu0 0.0
        %331 = vmatprep.subr.mxu0 0.0
        %332 = vmatpush1.msra.mxu0 0.0
        %333 = vmatprep.subr.mxu0 0.0
        %334 = vmatpush1.msra.mxu0 0.0
        %335 = vmatprep.subr.mxu0 0.0
        %336 = vmatpush1.msra.mxu0 0.0
        %337 = vmatprep.subr.mxu0 0.0
        %338 = vmatpush1.msra.mxu0 0.0
        %339 = vmatprep.subr.mxu0 0.0
        %340 = vmatpush1.msra.mxu0 0.0
        %341 = vmatprep.subr.mxu0 0.0
        %342 = vmatpush1.msra.mxu0 0.0
        %343 = vmatprep.subr.mxu0 0.0
        %344 = vmatpush1.msra.mxu0 0.0
        %345 = vmatprep.subr.mxu0 0.0
        %346 = vmatpush1.msra.mxu0 0.0
        %347 = vmatprep.subr.mxu0 0.0
        %348 = vmatpush1.msra.mxu0 0.0
        %349 = vmatprep.subr.mxu0 0.0
        %350 = vmatpush1.msra.mxu0 0.0
        %351 = vmatprep.subr.mxu0 0.0
        %352 = vmatpush1.msra.mxu0 0.0
        %353 = vmatprep.subr.mxu0 0.0
        %354 = vmatpush1.msra.mxu0 0.0
        %355 = vmatprep.subr.mxu0 0.0
        %356 = vmatpush1.msra.mxu0 0.0
        %357 = vmatprep.subr.mxu0 0.0
        %358 = vmatpush1.msra.mxu0 0.0
        %359 = vmatprep.subr.mxu0 0.0
        %360 = vmatpush1.msra.mxu0 0.0
        %361 = vmatprep.subr.mxu0 0.0
        %362 = vmatpush1.msra.mxu0 0.0
        %363 = vmatprep.mubr.f32.mxu0 0.0
        %364 = vmatmul.mubr.f32.gmra.mrb[0].mxu0 %v219
        %v365 = vpop.f32.mrb[0].mxu0
        %v366 = vadd.f32 0.0, %v365
        %v367 = vpop.f32.mrb[0].mxu0
        %368 = vdwg.mxu0
        %v370 = vsel %vm217, %v198, 0
        %v372 = vsel %vm221, %v196, 0
        %v374 = vsel %vm221, %v203, 0
        %v376 = vsel %vm221, %v197, 0
        %378 = vmatprep.subr.mxu0 %v374
        %379 = vmatpush1.msra.mxu0 %v372
        %380 = vmatprep.subr.mxu0 0.0
        %381 = vmatpush1.msra.mxu0 0.0
        %382 = vmatprep.subr.mxu0 0.0
        %383 = vmatpush1.msra.mxu0 0.0
        %384 = vmatprep.subr.mxu0 0.0
        %385 = vmatpush1.msra.mxu0 0.0
        %386 = vmatprep.subr.mxu0 0.0
        %387 = vmatpush1.msra.mxu0 0.0
        %388 = vmatprep.subr.mxu0 0.0
        %389 = vmatpush1.msra.mxu0 0.0
        %390 = vmatprep.subr.mxu0 0.0
        %391 = vmatpush1.msra.mxu0 0.0
        %392 = vmatprep.subr.mxu0 0.0
        %393 = vmatpush1.msra.mxu0 0.0
        %394 = vmatprep.subr.mxu0 0.0
        %395 = vmatpush1.msra.mxu0 0.0
        %396 = vmatprep.subr.mxu0 0.0
        %397 = vmatpush1.msra.mxu0 0.0
        %398 = vmatprep.subr.mxu0 0.0
        %399 = vmatpush1.msra.mxu0 0.0
        %400 = vmatprep.subr.mxu0 0.0
        %401 = vmatpush1.msra.mxu0 0.0
        %402 = vmatprep.subr.mxu0 0.0
        %403 = vmatpush1.msra.mxu0 0.0
        %404 = vmatprep.subr.mxu0 0.0
        %405 = vmatpush1.msra.mxu0 0.0
        %406 = vmatprep.subr.mxu0 0.0
        %407 = vmatpush1.msra.mxu0 0.0
        %408 = vmatprep.subr.mxu0 0.0
        %409 = vmatpush1.msra.mxu0 0.0
        %410 = vmatprep.subr.mxu0 0.0
        %411 = vmatpush1.msra.mxu0 0.0
        %412 = vmatprep.subr.mxu0 0.0
        %413 = vmatpush1.msra.mxu0 0.0
        %414 = vmatprep.subr.mxu0 0.0
        %415 = vmatpush1.msra.mxu0 0.0
        %416 = vmatprep.subr.mxu0 0.0
        %417 = vmatpush1.msra.mxu0 0.0
        %418 = vmatprep.subr.mxu0 0.0
        %419 = vmatpush1.msra.mxu0 0.0
        %420 = vmatprep.subr.mxu0 0.0
        %421 = vmatpush1.msra.mxu0 0.0
        %422 = vmatprep.subr.mxu0 0.0
        %423 = vmatpush1.msra.mxu0 0.0
        %424 = vmatprep.subr.mxu0 0.0
        %425 = vmatpush1.msra.mxu0 0.0
        %426 = vmatprep.subr.mxu0 0.0
        %427 = vmatpush1.msra.mxu0 0.0
        %428 = vmatprep.subr.mxu0 0.0
        %429 = vmatpush1.msra.mxu0 0.0
        %430 = vmatprep.subr.mxu0 0.0
        %431 = vmatpush1.msra.mxu0 0.0
        %432 = vmatprep.subr.mxu0 0.0
        %433 = vmatpush1.msra.mxu0 0.0
        %434 = vmatprep.subr.mxu0 0.0
        %435 = vmatpush1.msra.mxu0 0.0
        %436 = vmatprep.subr.mxu0 0.0
        %437 = vmatpush1.msra.mxu0 0.0
        %438 = vmatprep.subr.mxu0 0.0
        %439 = vmatpush1.msra.mxu0 0.0
        %440 = vmatprep.subr.mxu0 0.0
        %441 = vmatpush1.msra.mxu0 0.0
        %442 = vmatprep.mubr.f32.mxu0 0.0
        %443 = vmatmul.mubr.f32.gmra.mrb[0].mxu0 %v370
        %v444 = vpop.f32.mrb[0].mxu0
        %v445 = vadd.f32 %v295, %v444
        %v446 = vpop.f32.mrb[0].mxu0
        %v447 = vadd.f32 %v297, %v446
        %448 = vdwg.mxu0
        %449 = vmatprep.subr.mxu0 0.0
        %450 = vmatpush1.msra.mxu0 %v376
        %451 = vmatprep.subr.mxu0 0.0
        %452 = vmatpush1.msra.mxu0 0.0
        %453 = vmatprep.subr.mxu0 0.0
        %454 = vmatpush1.msra.mxu0 0.0
        %455 = vmatprep.subr.mxu0 0.0
        %456 = vmatpush1.msra.mxu0 0.0
        %457 = vmatprep.subr.mxu0 0.0
        %458 = vmatpush1.msra.mxu0 0.0
        %459 = vmatprep.subr.mxu0 0.0
        %460 = vmatpush1.msra.mxu0 0.0
        %461 = vmatprep.subr.mxu0 0.0
        %462 = vmatpush1.msra.mxu0 0.0
        %463 = vmatprep.subr.mxu0 0.0
        %464 = vmatpush1.msra.mxu0 0.0
        %465 = vmatprep.subr.mxu0 0.0
        %466 = vmatpush1.msra.mxu0 0.0
        %467 = vmatprep.subr.mxu0 0.0
        %468 = vmatpush1.msra.mxu0 0.0
        %469 = vmatprep.subr.mxu0 0.0
        %470 = vmatpush1.msra.mxu0 0.0
        %471 = vmatprep.subr.mxu0 0.0
        %472 = vmatpush1.msra.mxu0 0.0
        %473 = vmatprep.subr.mxu0 0.0
        %474 = vmatpush1.msra.mxu0 0.0
        %475 = vmatprep.subr.mxu0 0.0
        %476 = vmatpush1.msra.mxu0 0.0
        %477 = vmatprep.subr.mxu0 0.0
        %478 = vmatpush1.msra.mxu0 0.0
        %479 = vmatprep.subr.mxu0 0.0
        %480 = vmatpush1.msra.mxu0 0.0
        %481 = vmatprep.subr.mxu0 0.0
        %482 = vmatpush1.msra.mxu0 0.0
        %483 = vmatprep.subr.mxu0 0.0
        %484 = vmatpush1.msra.mxu0 0.0
        %485 = vmatprep.subr.mxu0 0.0
        %486 = vmatpush1.msra.mxu0 0.0
        %487 = vmatprep.subr.mxu0 0.0
        %488 = vmatpush1.msra.mxu0 0.0
        %489 = vmatprep.subr.mxu0 0.0
        %490 = vmatpush1.msra.mxu0 0.0
        %491 = vmatprep.subr.mxu0 0.0
        %492 = vmatpush1.msra.mxu0 0.0
        %493 = vmatprep.subr.mxu0 0.0
        %494 = vmatpush1.msra.mxu0 0.0
        %495 = vmatprep.subr.mxu0 0.0
        %496 = vmatpush1.msra.mxu0 0.0
        %497 = vmatprep.subr.mxu0 0.0
        %498 = vmatpush1.msra.mxu0 0.0
        %499 = vmatprep.subr.mxu0 0.0
        %500 = vmatpush1.msra.mxu0 0.0
        %501 = vmatprep.subr.mxu0 0.0
        %502 = vmatpush1.msra.mxu0 0.0
        %503 = vmatprep.subr.mxu0 0.0
        %504 = vmatpush1.msra.mxu0 0.0
        %505 = vmatprep.subr.mxu0 0.0
        %506 = vmatpush1.msra.mxu0 0.0
        %507 = vmatprep.subr.mxu0 0.0
        %508 = vmatpush1.msra.mxu0 0.0
        %509 = vmatprep.subr.mxu0 0.0
        %510 = vmatpush1.msra.mxu0 0.0
        %511 = vmatprep.subr.mxu0 0.0
        %512 = vmatpush1.msra.mxu0 0.0
        %513 = vmatprep.mubr.f32.mxu0 0.0
        %514 = vmatmul.mubr.f32.gmra.mrb[0].mxu0 %v370
        %v515 = vpop.f32.mrb[0].mxu0
        %v516 = vadd.f32 %v366, %v515
        %v517 = vpop.f32.mrb[0].mxu0
        %518 = vdwg.mxu0
        %s519 = scalar_lea.vmem %s1, 16
        %v520 = vld [vmem:[%s519] sm:$0xff]
        %521 = vrot.lane.b32.xlu0 %v196, 126
        %v522 = vpop.permute.xlu0 %521
        %523 = vrot.lane.b32.xlu0 %v203, 126
        %v524 = vpop.permute.xlu0 %523
        %525 = vrot.lane.b32.xlu0 %v197, 126
        %v526 = vpop.permute.xlu0 %525
        %527 = vrot.lane.b32.xlu0 %v204, 126
        %v528 = vpop.permute.xlu0 %527
        %vm529 = vcmask 1031168
        %v530 = vsel %vm529, %v522, %v524
        %v531 = vsel %vm529, %v524, %v526
        %v532 = vsel %vm529, %v526, %v528
        %v534 = vsel %vm217, %v520, 0
        %v536 = vsel %vm221, %v530, 0
        %v538 = vsel %vm221, %v531, 0
        %v540 = vsel %vm221, %v532, 0
        %542 = vmatprep.subr.mxu0 %v538
        %543 = vmatpush1.msra.mxu0 %v536
        %544 = vmatprep.subr.mxu0 0.0
        %545 = vmatpush1.msra.mxu0 0.0
        %546 = vmatprep.subr.mxu0 0.0
        %547 = vmatpush1.msra.mxu0 0.0
        %548 = vmatprep.subr.mxu0 0.0
        %549 = vmatpush1.msra.mxu0 0.0
        %550 = vmatprep.subr.mxu0 0.0
        %551 = vmatpush1.msra.mxu0 0.0
        %552 = vmatprep.subr.mxu0 0.0
        %553 = vmatpush1.msra.mxu0 0.0
        %554 = vmatprep.subr.mxu0 0.0
        %555 = vmatpush1.msra.mxu0 0.0
        %556 = vmatprep.subr.mxu0 0.0
        %557 = vmatpush1.msra.mxu0 0.0
        %558 = vmatprep.subr.mxu0 0.0
        %559 = vmatpush1.msra.mxu0 0.0
        %560 = vmatprep.subr.mxu0 0.0
        %561 = vmatpush1.msra.mxu0 0.0
        %562 = vmatprep.subr.mxu0 0.0
        %563 = vmatpush1.msra.mxu0 0.0
        %564 = vmatprep.subr.mxu0 0.0
        %565 = vmatpush1.msra.mxu0 0.0
        %566 = vmatprep.subr.mxu0 0.0
        %567 = vmatpush1.msra.mxu0 0.0
        %568 = vmatprep.subr.mxu0 0.0
        %569 = vmatpush1.msra.mxu0 0.0
        %570 = vmatprep.subr.mxu0 0.0
        %571 = vmatpush1.msra.mxu0 0.0
        %572 = vmatprep.subr.mxu0 0.0
        %573 = vmatpush1.msra.mxu0 0.0
        %574 = vmatprep.subr.mxu0 0.0
        %575 = vmatpush1.msra.mxu0 0.0
        %576 = vmatprep.subr.mxu0 0.0
        %577 = vmatpush1.msra.mxu0 0.0
        %578 = vmatprep.subr.mxu0 0.0
        %579 = vmatpush1.msra.mxu0 0.0
        %580 = vmatprep.subr.mxu0 0.0
        %581 = vmatpush1.msra.mxu0 0.0
        %582 = vmatprep.subr.mxu0 0.0
        %583 = vmatpush1.msra.mxu0 0.0
        %584 = vmatprep.subr.mxu0 0.0
        %585 = vmatpush1.msra.mxu0 0.0
        %586 = vmatprep.subr.mxu0 0.0
        %587 = vmatpush1.msra.mxu0 0.0
        %588 = vmatprep.subr.mxu0 0.0
        %589 = vmatpush1.msra.mxu0 0.0
        %590 = vmatprep.subr.mxu0 0.0
        %591 = vmatpush1.msra.mxu0 0.0
        %592 = vmatprep.subr.mxu0 0.0
        %593 = vmatpush1.msra.mxu0 0.0
        %594 = vmatprep.subr.mxu0 0.0
        %595 = vmatpush1.msra.mxu0 0.0
        %596 = vmatprep.subr.mxu0 0.0
        %597 = vmatpush1.msra.mxu0 0.0
        %598 = vmatprep.subr.mxu0 0.0
        %599 = vmatpush1.msra.mxu0 0.0
        %600 = vmatprep.subr.mxu0 0.0
        %601 = vmatpush1.msra.mxu0 0.0
        %602 = vmatprep.subr.mxu0 0.0
        %603 = vmatpush1.msra.mxu0 0.0
        %604 = vmatprep.subr.mxu0 0.0
        %605 = vmatpush1.msra.mxu0 0.0
        %606 = vmatprep.mubr.f32.mxu0 0.0
        %607 = vmatmul.mubr.f32.gmra.mrb[0].mxu0 %v534
        %v608 = vpop.f32.mrb[0].mxu0
        %v609 = vadd.f32 0.0, %v608
        %v610 = vpop.f32.mrb[0].mxu0
        %v611 = vadd.f32 0.0, %v610
        %612 = vdwg.mxu0
        %613 = vmatprep.subr.mxu0 0.0
        %614 = vmatpush1.msra.mxu0 %v540
        %615 = vmatprep.subr.mxu0 0.0
        %616 = vmatpush1.msra.mxu0 0.0
        %617 = vmatprep.subr.mxu0 0.0
        %618 = vmatpush1.msra.mxu0 0.0
        %619 = vmatprep.subr.mxu0 0.0
        %620 = vmatpush1.msra.mxu0 0.0
        %621 = vmatprep.subr.mxu0 0.0
        %622 = vmatpush1.msra.mxu0 0.0
        %623 = vmatprep.subr.mxu0 0.0
        %624 = vmatpush1.msra.mxu0 0.0
        %625 = vmatprep.subr.mxu0 0.0
        %626 = vmatpush1.msra.mxu0 0.0
        %627 = vmatprep.subr.mxu0 0.0
        %628 = vmatpush1.msra.mxu0 0.0
        %629 = vmatprep.subr.mxu0 0.0
        %630 = vmatpush1.msra.mxu0 0.0
        %631 = vmatprep.subr.mxu0 0.0
        %632 = vmatpush1.msra.mxu0 0.0
        %633 = vmatprep.subr.mxu0 0.0
        %634 = vmatpush1.msra.mxu0 0.0
        %635 = vmatprep.subr.mxu0 0.0
        %636 = vmatpush1.msra.mxu0 0.0
        %637 = vmatprep.subr.mxu0 0.0
        %638 = vmatpush1.msra.mxu0 0.0
        %639 = vmatprep.subr.mxu0 0.0
        %640 = vmatpush1.msra.mxu0 0.0
        %641 = vmatprep.subr.mxu0 0.0
        %642 = vmatpush1.msra.mxu0 0.0
        %643 = vmatprep.subr.mxu0 0.0
        %644 = vmatpush1.msra.mxu0 0.0
        %645 = vmatprep.subr.mxu0 0.0
        %646 = vmatpush1.msra.mxu0 0.0
        %647 = vmatprep.subr.mxu0 0.0
        %648 = vmatpush1.msra.mxu0 0.0
        %649 = vmatprep.subr.mxu0 0.0
        %650 = vmatpush1.msra.mxu0 0.0
        %651 = vmatprep.subr.mxu0 0.0
        %652 = vmatpush1.msra.mxu0 0.0
        %653 = vmatprep.subr.mxu0 0.0
        %654 = vmatpush1.msra.mxu0 0.0
        %655 = vmatprep.subr.mxu0 0.0
        %656 = vmatpush1.msra.mxu0 0.0
        %657 = vmatprep.subr.mxu0 0.0
        %658 = vmatpush1.msra.mxu0 0.0
        %659 = vmatprep.subr.mxu0 0.0
        %660 = vmatpush1.msra.mxu0 0.0
        %661 = vmatprep.subr.mxu0 0.0
        %662 = vmatpush1.msra.mxu0 0.0
        %663 = vmatprep.subr.mxu0 0.0
        %664 = vmatpush1.msra.mxu0 0.0
        %665 = vmatprep.subr.mxu0 0.0
        %666 = vmatpush1.msra.mxu0 0.0
        %667 = vmatprep.subr.mxu0 0.0
        %668 = vmatpush1.msra.mxu0 0.0
        %669 = vmatprep.subr.mxu0 0.0
        %670 = vmatpush1.msra.mxu0 0.0
        %671 = vmatprep.subr.mxu0 0.0
        %672 = vmatpush1.msra.mxu0 0.0
        %673 = vmatprep.subr.mxu0 0.0
        %674 = vmatpush1.msra.mxu0 0.0
        %675 = vmatprep.subr.mxu0 0.0
        %676 = vmatpush1.msra.mxu0 0.0
        %677 = vmatprep.mubr.f32.mxu0 0.0
        %678 = vmatmul.mubr.f32.gmra.mrb[0].mxu0 %v534
        %v679 = vpop.f32.mrb[0].mxu0
        %v680 = vadd.f32 0.0, %v679
        %v681 = vpop.f32.mrb[0].mxu0
        %682 = vdwg.mxu0
        %v683 = vadd.f32 %v445, %v609
        %v684 = vadd.f32 %v447, %v611
        %v685 = vadd.f32 %v516, %v680
        %s686 = scalar_lea.vmem %s1, 24
        %v687 = vld [vmem:[%s686] sm:$0xff]
        %688 = vrot.lane.b32.xlu0 %v196, 110
        %v689 = vpop.permute.xlu0 %688
        %690 = vrot.lane.b32.xlu0 %v203, 110
        %v691 = vpop.permute.xlu0 %690
        %692 = vrot.lane.b32.xlu0 %v197, 110
        %v693 = vpop.permute.xlu0 %692
        %694 = vrot.lane.b32.xlu0 %v204, 110
        %v695 = vpop.permute.xlu0 %694
        %vm696 = vcmask 900096
        %v697 = vsel %vm696, %v689, %v691
        %v698 = vsel %vm696, %v691, %v693
        %v699 = vsel %vm696, %v693, %v695
        %v701 = vsel %vm217, %v687, 0
        %v703 = vsel %vm221, %v697, 0
        %v705 = vsel %vm221, %v698, 0
        %v707 = vsel %vm221, %v699, 0
        %709 = vmatprep.subr.mxu0 %v705
        %710 = vmatpush1.msra.mxu0 %v703
        %711 = vmatprep.subr.mxu0 0.0
        %712 = vmatpush1.msra.mxu0 0.0
        %713 = vmatprep.subr.mxu0 0.0
        %714 = vmatpush1.msra.mxu0 0.0
        %715 = vmatprep.subr.mxu0 0.0
        %716 = vmatpush1.msra.mxu0 0.0
        %717 = vmatprep.subr.mxu0 0.0
        %718 = vmatpush1.msra.mxu0 0.0
        %719 = vmatprep.subr.mxu0 0.0
        %720 = vmatpush1.msra.mxu0 0.0
        %721 = vmatprep.subr.mxu0 0.0
        %722 = vmatpush1.msra.mxu0 0.0
        %723 = vmatprep.subr.mxu0 0.0
        %724 = vmatpush1.msra.mxu0 0.0
        %725 = vmatprep.subr.mxu0 0.0
        %726 = vmatpush1.msra.mxu0 0.0
        %727 = vmatprep.subr.mxu0 0.0
        %728 = vmatpush1.msra.mxu0 0.0
        %729 = vmatprep.subr.mxu0 0.0
        %730 = vmatpush1.msra.mxu0 0.0
        %731 = vmatprep.subr.mxu0 0.0
        %732 = vmatpush1.msra.mxu0 0.0
        %733 = vmatprep.subr.mxu0 0.0
        %734 = vmatpush1.msra.mxu0 0.0
        %735 = vmatprep.subr.mxu0 0.0
        %736 = vmatpush1.msra.mxu0 0.0
        %737 = vmatprep.subr.mxu0 0.0
        %738 = vmatpush1.msra.mxu0 0.0
        %739 = vmatprep.subr.mxu0 0.0
        %740 = vmatpush1.msra.mxu0 0.0
        %741 = vmatprep.subr.mxu0 0.0
        %742 = vmatpush1.msra.mxu0 0.0
        %743 = vmatprep.subr.mxu0 0.0
        %744 = vmatpush1.msra.mxu0 0.0
        %745 = vmatprep.subr.mxu0 0.0
        %746 = vmatpush1.msra.mxu0 0.0
        %747 = vmatprep.subr.mxu0 0.0
        %748 = vmatpush1.msra.mxu0 0.0
        %749 = vmatprep.subr.mxu0 0.0
        %750 = vmatpush1.msra.mxu0 0.0
        %751 = vmatprep.subr.mxu0 0.0
        %752 = vmatpush1.msra.mxu0 0.0
        %753 = vmatprep.subr.mxu0 0.0
        %754 = vmatpush1.msra.mxu0 0.0
        %755 = vmatprep.subr.mxu0 0.0
        %756 = vmatpush1.msra.mxu0 0.0
        %757 = vmatprep.subr.mxu0 0.0
        %758 = vmatpush1.msra.mxu0 0.0
        %759 = vmatprep.subr.mxu0 0.0
        %760 = vmatpush1.msra.mxu0 0.0
        %761 = vmatprep.subr.mxu0 0.0
        %762 = vmatpush1.msra.mxu0 0.0
        %763 = vmatprep.subr.mxu0 0.0
        %764 = vmatpush1.msra.mxu0 0.0
        %765 = vmatprep.subr.mxu0 0.0
        %766 = vmatpush1.msra.mxu0 0.0
        %767 = vmatprep.subr.mxu0 0.0
        %768 = vmatpush1.msra.mxu0 0.0
        %769 = vmatprep.subr.mxu0 0.0
        %770 = vmatpush1.msra.mxu0 0.0
        %771 = vmatprep.subr.mxu0 0.0
        %772 = vmatpush1.msra.mxu0 0.0
        %773 = vmatprep.mubr.f32.mxu0 0.0
        %774 = vmatmul.mubr.f32.gmra.mrb[0].mxu0 %v701
        %v775 = vpop.f32.mrb[0].mxu0
        %v776 = vadd.f32 0.0, %v775
        %v777 = vpop.f32.mrb[0].mxu0
        %v778 = vadd.f32 0.0, %v777
        %779 = vdwg.mxu0
        %780 = vmatprep.subr.mxu0 0.0
        %781 = vmatpush1.msra.mxu0 %v707
        %782 = vmatprep.subr.mxu0 0.0
        %783 = vmatpush1.msra.mxu0 0.0
        %784 = vmatprep.subr.mxu0 0.0
        %785 = vmatpush1.msra.mxu0 0.0
        %786 = vmatprep.subr.mxu0 0.0
        %787 = vmatpush1.msra.mxu0 0.0
        %788 = vmatprep.subr.mxu0 0.0
        %789 = vmatpush1.msra.mxu0 0.0
        %790 = vmatprep.subr.mxu0 0.0
        %791 = vmatpush1.msra.mxu0 0.0
        %792 = vmatprep.subr.mxu0 0.0
        %793 = vmatpush1.msra.mxu0 0.0
        %794 = vmatprep.subr.mxu0 0.0
        %795 = vmatpush1.msra.mxu0 0.0
        %796 = vmatprep.subr.mxu0 0.0
        %797 = vmatpush1.msra.mxu0 0.0
        %798 = vmatprep.subr.mxu0 0.0
        %799 = vmatpush1.msra.mxu0 0.0
        %800 = vmatprep.subr.mxu0 0.0
        %801 = vmatpush1.msra.mxu0 0.0
        %802 = vmatprep.subr.mxu0 0.0
        %803 = vmatpush1.msra.mxu0 0.0
        %804 = vmatprep.subr.mxu0 0.0
        %805 = vmatpush1.msra.mxu0 0.0
        %806 = vmatprep.subr.mxu0 0.0
        %807 = vmatpush1.msra.mxu0 0.0
        %808 = vmatprep.subr.mxu0 0.0
        %809 = vmatpush1.msra.mxu0 0.0
        %810 = vmatprep.subr.mxu0 0.0
        %811 = vmatpush1.msra.mxu0 0.0
        %812 = vmatprep.subr.mxu0 0.0
        %813 = vmatpush1.msra.mxu0 0.0
        %814 = vmatprep.subr.mxu0 0.0
        %815 = vmatpush1.msra.mxu0 0.0
        %816 = vmatprep.subr.mxu0 0.0
        %817 = vmatpush1.msra.mxu0 0.0
        %818 = vmatprep.subr.mxu0 0.0
        %819 = vmatpush1.msra.mxu0 0.0
        %820 = vmatprep.subr.mxu0 0.0
        %821 = vmatpush1.msra.mxu0 0.0
        %822 = vmatprep.subr.mxu0 0.0
        %823 = vmatpush1.msra.mxu0 0.0
        %824 = vmatprep.subr.mxu0 0.0
        %825 = vmatpush1.msra.mxu0 0.0
        %826 = vmatprep.subr.mxu0 0.0
        %827 = vmatpush1.msra.mxu0 0.0
        %828 = vmatprep.subr.mxu0 0.0
        %829 = vmatpush1.msra.mxu0 0.0
        %830 = vmatprep.subr.mxu0 0.0
        %831 = vmatpush1.msra.mxu0 0.0
        %832 = vmatprep.subr.mxu0 0.0
        %833 = vmatpush1.msra.mxu0 0.0
        %834 = vmatprep.subr.mxu0 0.0
        %835 = vmatpush1.msra.mxu0 0.0
        %836 = vmatprep.subr.mxu0 0.0
        %837 = vmatpush1.msra.mxu0 0.0
        %838 = vmatprep.subr.mxu0 0.0
        %839 = vmatpush1.msra.mxu0 0.0
        %840 = vmatprep.subr.mxu0 0.0
        %841 = vmatpush1.msra.mxu0 0.0
        %842 = vmatprep.subr.mxu0 0.0
        %843 = vmatpush1.msra.mxu0 0.0
        %844 = vmatprep.mubr.f32.mxu0 0.0
        %845 = vmatmul.mubr.f32.gmra.mrb[0].mxu0 %v701
        %v846 = vpop.f32.mrb[0].mxu0
        %v847 = vadd.f32 0.0, %v846
        %v848 = vpop.f32.mrb[0].mxu0
        %849 = vdwg.mxu0
        %v850 = vadd.f32 %v683, %v776
        %v851 = vadd.f32 %v684, %v778
        %v852 = vadd.f32 %v685, %v847
        %s853 = scalar_lea.vmem %s1, 32
        %v854 = vld [vmem:[%s853] sm:$0xff]
        %855 = vrot.lane.b32.xlu0 %v196, 109
        %v856 = vpop.permute.xlu0 %855
        %857 = vrot.lane.b32.xlu0 %v203, 109
        %v858 = vpop.permute.xlu0 %857
        %859 = vrot.lane.b32.xlu0 %v197, 109
        %v860 = vpop.permute.xlu0 %859
        %861 = vrot.lane.b32.xlu0 %v204, 109
        %v862 = vpop.permute.xlu0 %861
        %vm863 = vcmask 891904
        %v864 = vsel %vm863, %v856, %v858
        %v865 = vsel %vm863, %v858, %v860
        %v866 = vsel %vm863, %v860, %v862
        %v868 = vsel %vm217, %v854, 0
        %v870 = vsel %vm221, %v864, 0
        %v872 = vsel %vm221, %v865, 0
        %v874 = vsel %vm221, %v866, 0
        %876 = vmatprep.subr.mxu0 %v872
        %877 = vmatpush1.msra.mxu0 %v870
        %878 = vmatprep.subr.mxu0 0.0
        %879 = vmatpush1.msra.mxu0 0.0
        %880 = vmatprep.subr.mxu0 0.0
        %881 = vmatpush1.msra.mxu0 0.0
        %882 = vmatprep.subr.mxu0 0.0
        %883 = vmatpush1.msra.mxu0 0.0
        %884 = vmatprep.subr.mxu0 0.0
        %885 = vmatpush1.msra.mxu0 0.0
        %886 = vmatprep.subr.mxu0 0.0
        %887 = vmatpush1.msra.mxu0 0.0
        %888 = vmatprep.subr.mxu0 0.0
        %889 = vmatpush1.msra.mxu0 0.0
        %890 = vmatprep.subr.mxu0 0.0
        %891 = vmatpush1.msra.mxu0 0.0
        %892 = vmatprep.subr.mxu0 0.0
        %893 = vmatpush1.msra.mxu0 0.0
        %894 = vmatprep.subr.mxu0 0.0
        %895 = vmatpush1.msra.mxu0 0.0
        %896 = vmatprep.subr.mxu0 0.0
        %897 = vmatpush1.msra.mxu0 0.0
        %898 = vmatprep.subr.mxu0 0.0
        %899 = vmatpush1.msra.mxu0 0.0
        %900 = vmatprep.subr.mxu0 0.0
        %901 = vmatpush1.msra.mxu0 0.0
        %902 = vmatprep.subr.mxu0 0.0
        %903 = vmatpush1.msra.mxu0 0.0
        %904 = vmatprep.subr.mxu0 0.0
        %905 = vmatpush1.msra.mxu0 0.0
        %906 = vmatprep.subr.mxu0 0.0
        %907 = vmatpush1.msra.mxu0 0.0
        %908 = vmatprep.subr.mxu0 0.0
        %909 = vmatpush1.msra.mxu0 0.0
        %910 = vmatprep.subr.mxu0 0.0
        %911 = vmatpush1.msra.mxu0 0.0
        %912 = vmatprep.subr.mxu0 0.0
        %913 = vmatpush1.msra.mxu0 0.0
        %914 = vmatprep.subr.mxu0 0.0
        %915 = vmatpush1.msra.mxu0 0.0
        %916 = vmatprep.subr.mxu0 0.0
        %917 = vmatpush1.msra.mxu0 0.0
        %918 = vmatprep.subr.mxu0 0.0
        %919 = vmatpush1.msra.mxu0 0.0
        %920 = vmatprep.subr.mxu0 0.0
        %921 = vmatpush1.msra.mxu0 0.0
        %922 = vmatprep.subr.mxu0 0.0
        %923 = vmatpush1.msra.mxu0 0.0
        %924 = vmatprep.subr.mxu0 0.0
        %925 = vmatpush1.msra.mxu0 0.0
        %926 = vmatprep.subr.mxu0 0.0
        %927 = vmatpush1.msra.mxu0 0.0
        %928 = vmatprep.subr.mxu0 0.0
        %929 = vmatpush1.msra.mxu0 0.0
        %930 = vmatprep.subr.mxu0 0.0
        %931 = vmatpush1.msra.mxu0 0.0
        %932 = vmatprep.subr.mxu0 0.0
        %933 = vmatpush1.msra.mxu0 0.0
        %934 = vmatprep.subr.mxu0 0.0
        %935 = vmatpush1.msra.mxu0 0.0
        %936 = vmatprep.subr.mxu0 0.0
        %937 = vmatpush1.msra.mxu0 0.0
        %938 = vmatprep.subr.mxu0 0.0
        %939 = vmatpush1.msra.mxu0 0.0
        %940 = vmatprep.mubr.f32.mxu0 0.0
        %941 = vmatmul.mubr.f32.gmra.mrb[0].mxu0 %v868
        %v942 = vpop.f32.mrb[0].mxu0
        %v943 = vadd.f32 0.0, %v942
        %v944 = vpop.f32.mrb[0].mxu0
        %v945 = vadd.f32 0.0, %v944
        %946 = vdwg.mxu0
        %947 = vmatprep.subr.mxu0 0.0
        %948 = vmatpush1.msra.mxu0 %v874
        %949 = vmatprep.subr.mxu0 0.0
        %950 = vmatpush1.msra.mxu0 0.0
        %951 = vmatprep.subr.mxu0 0.0
        %952 = vmatpush1.msra.mxu0 0.0
        %953 = vmatprep.subr.mxu0 0.0
        %954 = vmatpush1.msra.mxu0 0.0
        %955 = vmatprep.subr.mxu0 0.0
        %956 = vmatpush1.msra.mxu0 0.0
        %957 = vmatprep.subr.mxu0 0.0
        %958 = vmatpush1.msra.mxu0 0.0
        %959 = vmatprep.subr.mxu0 0.0
        %960 = vmatpush1.msra.mxu0 0.0
        %961 = vmatprep.subr.mxu0 0.0
        %962 = vmatpush1.msra.mxu0 0.0
        %963 = vmatprep.subr.mxu0 0.0
        %964 = vmatpush1.msra.mxu0 0.0
        %965 = vmatprep.subr.mxu0 0.0
        %966 = vmatpush1.msra.mxu0 0.0
        %967 = vmatprep.subr.mxu0 0.0
        %968 = vmatpush1.msra.mxu0 0.0
        %969 = vmatprep.subr.mxu0 0.0
        %970 = vmatpush1.msra.mxu0 0.0
        %971 = vmatprep.subr.mxu0 0.0
        %972 = vmatpush1.msra.mxu0 0.0
        %973 = vmatprep.subr.mxu0 0.0
        %974 = vmatpush1.msra.mxu0 0.0
        %975 = vmatprep.subr.mxu0 0.0
        %976 = vmatpush1.msra.mxu0 0.0
        %977 = vmatprep.subr.mxu0 0.0
        %978 = vmatpush1.msra.mxu0 0.0
        %979 = vmatprep.subr.mxu0 0.0
        %980 = vmatpush1.msra.mxu0 0.0
        %981 = vmatprep.subr.mxu0 0.0
        %982 = vmatpush1.msra.mxu0 0.0
        %983 = vmatprep.subr.mxu0 0.0
        %984 = vmatpush1.msra.mxu0 0.0
        %985 = vmatprep.subr.mxu0 0.0
        %986 = vmatpush1.msra.mxu0 0.0
        %987 = vmatprep.subr.mxu0 0.0
        %988 = vmatpush1.msra.mxu0 0.0
        %989 = vmatprep.subr.mxu0 0.0
        %990 = vmatpush1.msra.mxu0 0.0
        %991 = vmatprep.subr.mxu0 0.0
        %992 = vmatpush1.msra.mxu0 0.0
        %993 = vmatprep.subr.mxu0 0.0
        %994 = vmatpush1.msra.mxu0 0.0
        %995 = vmatprep.subr.mxu0 0.0
        %996 = vmatpush1.msra.mxu0 0.0
        %997 = vmatprep.subr.mxu0 0.0
        %998 = vmatpush1.msra.mxu0 0.0
        %999 = vmatprep.subr.mxu0 0.0
        %1000 = vmatpush1.msra.mxu0 0.0
        %1001 = vmatprep.subr.mxu0 0.0
        %1002 = vmatpush1.msra.mxu0 0.0
        %1003 = vmatprep.subr.mxu0 0.0
        %1004 = vmatpush1.msra.mxu0 0.0
        %1005 = vmatprep.subr.mxu0 0.0
        %1006 = vmatpush1.msra.mxu0 0.0
        %1007 = vmatprep.subr.mxu0 0.0
        %1008 = vmatpush1.msra.mxu0 0.0
        %1009 = vmatprep.subr.mxu0 0.0
        %1010 = vmatpush1.msra.mxu0 0.0
        %1011 = vmatprep.mubr.f32.mxu0 0.0
        %1012 = vmatmul.mubr.f32.gmra.mrb[0].mxu0 %v868
        %v1013 = vpop.f32.mrb[0].mxu0
        %v1014 = vadd.f32 0.0, %v1013
        %v1015 = vpop.f32.mrb[0].mxu0
        %1016 = vdwg.mxu0
        %v1017 = vadd.f32 %v850, %v943
        %v1018 = vadd.f32 %v851, %v945
        %v1019 = vadd.f32 %v852, %v1014
        %s1020 = scalar_lea.vmem %s1, 40
        %v1021 = vld [vmem:[%s1020] sm:$0xff]
        %1022 = vrot.lane.b32.xlu0 %v196, 108
        %v1023 = vpop.permute.xlu0 %1022
        %1024 = vrot.lane.b32.xlu0 %v203, 108
        %v1025 = vpop.permute.xlu0 %1024
        %1026 = vrot.lane.b32.xlu0 %v197, 108
        %v1027 = vpop.permute.xlu0 %1026
        %1028 = vrot.lane.b32.xlu0 %v204, 108
        %v1029 = vpop.permute.xlu0 %1028
        %vm1030 = vcmask 883712
        %v1031 = vsel %vm1030, %v1023, %v1025
        %v1032 = vsel %vm1030, %v1025, %v1027
        %v1033 = vsel %vm1030, %v1027, %v1029
        %v1035 = vsel %vm217, %v1021, 0
        %v1037 = vsel %vm221, %v1031, 0
        %v1039 = vsel %vm221, %v1032, 0
        %v1041 = vsel %vm221, %v1033, 0
        %1043 = vmatprep.subr.mxu0 %v1039
        %1044 = vmatpush1.msra.mxu0 %v1037
        %1045 = vmatprep.subr.mxu0 0.0
        %1046 = vmatpush1.msra.mxu0 0.0
        %1047 = vmatprep.subr.mxu0 0.0
        %1048 = vmatpush1.msra.mxu0 0.0
        %1049 = vmatprep.subr.mxu0 0.0
        %1050 = vmatpush1.msra.mxu0 0.0
        %1051 = vmatprep.subr.mxu0 0.0
        %1052 = vmatpush1.msra.mxu0 0.0
        %1053 = vmatprep.subr.mxu0 0.0
        %1054 = vmatpush1.msra.mxu0 0.0
        %1055 = vmatprep.subr.mxu0 0.0
        %1056 = vmatpush1.msra.mxu0 0.0
        %1057 = vmatprep.subr.mxu0 0.0
        %1058 = vmatpush1.msra.mxu0 0.0
        %1059 = vmatprep.subr.mxu0 0.0
        %1060 = vmatpush1.msra.mxu0 0.0
        %1061 = vmatprep.subr.mxu0 0.0
        %1062 = vmatpush1.msra.mxu0 0.0
        %1063 = vmatprep.subr.mxu0 0.0
        %1064 = vmatpush1.msra.mxu0 0.0
        %1065 = vmatprep.subr.mxu0 0.0
        %1066 = vmatpush1.msra.mxu0 0.0
        %1067 = vmatprep.subr.mxu0 0.0
        %1068 = vmatpush1.msra.mxu0 0.0
        %1069 = vmatprep.subr.mxu0 0.0
        %1070 = vmatpush1.msra.mxu0 0.0
        %1071 = vmatprep.subr.mxu0 0.0
        %1072 = vmatpush1.msra.mxu0 0.0
        %1073 = vmatprep.subr.mxu0 0.0
        %1074 = vmatpush1.msra.mxu0 0.0
        %1075 = vmatprep.subr.mxu0 0.0
        %1076 = vmatpush1.msra.mxu0 0.0
        %1077 = vmatprep.subr.mxu0 0.0
        %1078 = vmatpush1.msra.mxu0 0.0
        %1079 = vmatprep.subr.mxu0 0.0
        %1080 = vmatpush1.msra.mxu0 0.0
        %1081 = vmatprep.subr.mxu0 0.0
        %1082 = vmatpush1.msra.mxu0 0.0
        %1083 = vmatprep.subr.mxu0 0.0
        %1084 = vmatpush1.msra.mxu0 0.0
        %1085 = vmatprep.subr.mxu0 0.0
        %1086 = vmatpush1.msra.mxu0 0.0
        %1087 = vmatprep.subr.mxu0 0.0
        %1088 = vmatpush1.msra.mxu0 0.0
        %1089 = vmatprep.subr.mxu0 0.0
        %1090 = vmatpush1.msra.mxu0 0.0
        %1091 = vmatprep.subr.mxu0 0.0
        %1092 = vmatpush1.msra.mxu0 0.0
        %1093 = vmatprep.subr.mxu0 0.0
        %1094 = vmatpush1.msra.mxu0 0.0
        %1095 = vmatprep.subr.mxu0 0.0
        %1096 = vmatpush1.msra.mxu0 0.0
        %1097 = vmatprep.subr.mxu0 0.0
        %1098 = vmatpush1.msra.mxu0 0.0
        %1099 = vmatprep.subr.mxu0 0.0
        %1100 = vmatpush1.msra.mxu0 0.0
        %1101 = vmatprep.subr.mxu0 0.0
        %1102 = vmatpush1.msra.mxu0 0.0
        %1103 = vmatprep.subr.mxu0 0.0
        %1104 = vmatpush1.msra.mxu0 0.0
        %1105 = vmatprep.subr.mxu0 0.0
        %1106 = vmatpush1.msra.mxu0 0.0
        %1107 = vmatprep.mubr.f32.mxu0 0.0
        %1108 = vmatmul.mubr.f32.gmra.mrb[0].mxu0 %v1035
        %v1109 = vpop.f32.mrb[0].mxu0
        %v1110 = vadd.f32 0.0, %v1109
        %v1111 = vpop.f32.mrb[0].mxu0
        %v1112 = vadd.f32 0.0, %v1111
        %1113 = vdwg.mxu0
        %1114 = vmatprep.subr.mxu0 0.0
        %1115 = vmatpush1.msra.mxu0 %v1041
        %1116 = vmatprep.subr.mxu0 0.0
        %1117 = vmatpush1.msra.mxu0 0.0
        %1118 = vmatprep.subr.mxu0 0.0
        %1119 = vmatpush1.msra.mxu0 0.0
        %1120 = vmatprep.subr.mxu0 0.0
        %1121 = vmatpush1.msra.mxu0 0.0
        %1122 = vmatprep.subr.mxu0 0.0
        %1123 = vmatpush1.msra.mxu0 0.0
        %1124 = vmatprep.subr.mxu0 0.0
        %1125 = vmatpush1.msra.mxu0 0.0
        %1126 = vmatprep.subr.mxu0 0.0
        %1127 = vmatpush1.msra.mxu0 0.0
        %1128 = vmatprep.subr.mxu0 0.0
        %1129 = vmatpush1.msra.mxu0 0.0
        %1130 = vmatprep.subr.mxu0 0.0
        %1131 = vmatpush1.msra.mxu0 0.0
        %1132 = vmatprep.subr.mxu0 0.0
        %1133 = vmatpush1.msra.mxu0 0.0
        %1134 = vmatprep.subr.mxu0 0.0
        %1135 = vmatpush1.msra.mxu0 0.0
        %1136 = vmatprep.subr.mxu0 0.0
        %1137 = vmatpush1.msra.mxu0 0.0
        %1138 = vmatprep.subr.mxu0 0.0
        %1139 = vmatpush1.msra.mxu0 0.0
        %1140 = vmatprep.subr.mxu0 0.0
        %1141 = vmatpush1.msra.mxu0 0.0
        %1142 = vmatprep.subr.mxu0 0.0
        %1143 = vmatpush1.msra.mxu0 0.0
        %1144 = vmatprep.subr.mxu0 0.0
        %1145 = vmatpush1.msra.mxu0 0.0
        %1146 = vmatprep.subr.mxu0 0.0
        %1147 = vmatpush1.msra.mxu0 0.0
        %1148 = vmatprep.subr.mxu0 0.0
        %1149 = vmatpush1.msra.mxu0 0.0
        %1150 = vmatprep.subr.mxu0 0.0
        %1151 = vmatpush1.msra.mxu0 0.0
        %1152 = vmatprep.subr.mxu0 0.0
        %1153 = vmatpush1.msra.mxu0 0.0
        %1154 = vmatprep.subr.mxu0 0.0
        %1155 = vmatpush1.msra.mxu0 0.0
        %1156 = vmatprep.subr.mxu0 0.0
        %1157 = vmatpush1.msra.mxu0 0.0
        %1158 = vmatprep.subr.mxu0 0.0
        %1159 = vmatpush1.msra.mxu0 0.0
        %1160 = vmatprep.subr.mxu0 0.0
        %1161 = vmatpush1.msra.mxu0 0.0
        %1162 = vmatprep.subr.mxu0 0.0
        %1163 = vmatpush1.msra.mxu0 0.0
        %1164 = vmatprep.subr.mxu0 0.0
        %1165 = vmatpush1.msra.mxu0 0.0
        %1166 = vmatprep.subr.mxu0 0.0
        %1167 = vmatpush1.msra.mxu0 0.0
        %1168 = vmatprep.subr.mxu0 0.0
        %1169 = vmatpush1.msra.mxu0 0.0
        %1170 = vmatprep.subr.mxu0 0.0
        %1171 = vmatpush1.msra.mxu0 0.0
        %1172 = vmatprep.subr.mxu0 0.0
        %1173 = vmatpush1.msra.mxu0 0.0
        %1174 = vmatprep.subr.mxu0 0.0
        %1175 = vmatpush1.msra.mxu0 0.0
        %1176 = vmatprep.subr.mxu0 0.0
        %1177 = vmatpush1.msra.mxu0 0.0
        %1178 = vmatprep.mubr.f32.mxu0 0.0
        %1179 = vmatmul.mubr.f32.gmra.mrb[0].mxu0 %v1035
        %v1180 = vpop.f32.mrb[0].mxu0
        %v1181 = vadd.f32 0.0, %v1180
        %v1182 = vpop.f32.mrb[0].mxu0
        %1183 = vdwg.mxu0
        %v1184 = vadd.f32 %v1017, %v1110
        %v1185 = vadd.f32 %v1018, %v1112
        %v1186 = vadd.f32 %v1019, %v1181
        %s1187 = scalar_lea.vmem %s1, 48
        %v1188 = vld [vmem:[%s1187] sm:$0xff]
        %1189 = vrot.lane.b32.xlu0 %v196, 92
        %v1190 = vpop.permute.xlu0 %1189
        %1191 = vrot.lane.b32.xlu0 %v203, 92
        %v1192 = vpop.permute.xlu0 %1191
        %1193 = vrot.lane.b32.xlu0 %v197, 92
        %v1194 = vpop.permute.xlu0 %1193
        %1195 = vrot.lane.b32.xlu0 %v204, 92
        %v1196 = vpop.permute.xlu0 %1195
        %vm1197 = vcmask 752640
        %v1198 = vsel %vm1197, %v1190, %v1192
        %v1199 = vsel %vm1197, %v1192, %v1194
        %v1200 = vsel %vm1197, %v1194, %v1196
        %v1202 = vsel %vm217, %v1188, 0
        %v1204 = vsel %vm221, %v1198, 0
        %v1206 = vsel %vm221, %v1199, 0
        %v1208 = vsel %vm221, %v1200, 0
        %1210 = vmatprep.subr.mxu0 %v1206
        %1211 = vmatpush1.msra.mxu0 %v1204
        %1212 = vmatprep.subr.mxu0 0.0
        %1213 = vmatpush1.msra.mxu0 0.0
        %1214 = vmatprep.subr.mxu0 0.0
        %1215 = vmatpush1.msra.mxu0 0.0
        %1216 = vmatprep.subr.mxu0 0.0
        %1217 = vmatpush1.msra.mxu0 0.0
        %1218 = vmatprep.subr.mxu0 0.0
        %1219 = vmatpush1.msra.mxu0 0.0
        %1220 = vmatprep.subr.mxu0 0.0
        %1221 = vmatpush1.msra.mxu0 0.0
        %1222 = vmatprep.subr.mxu0 0.0
        %1223 = vmatpush1.msra.mxu0 0.0
        %1224 = vmatprep.subr.mxu0 0.0
        %1225 = vmatpush1.msra.mxu0 0.0
        %1226 = vmatprep.subr.mxu0 0.0
        %1227 = vmatpush1.msra.mxu0 0.0
        %1228 = vmatprep.subr.mxu0 0.0
        %1229 = vmatpush1.msra.mxu0 0.0
        %1230 = vmatprep.subr.mxu0 0.0
        %1231 = vmatpush1.msra.mxu0 0.0
        %1232 = vmatprep.subr.mxu0 0.0
        %1233 = vmatpush1.msra.mxu0 0.0
        %1234 = vmatprep.subr.mxu0 0.0
        %1235 = vmatpush1.msra.mxu0 0.0
        %1236 = vmatprep.subr.mxu0 0.0
        %1237 = vmatpush1.msra.mxu0 0.0
        %1238 = vmatprep.subr.mxu0 0.0
        %1239 = vmatpush1.msra.mxu0 0.0
        %1240 = vmatprep.subr.mxu0 0.0
        %1241 = vmatpush1.msra.mxu0 0.0
        %1242 = vmatprep.subr.mxu0 0.0
        %1243 = vmatpush1.msra.mxu0 0.0
        %1244 = vmatprep.subr.mxu0 0.0
        %1245 = vmatpush1.msra.mxu0 0.0
        %1246 = vmatprep.subr.mxu0 0.0
        %1247 = vmatpush1.msra.mxu0 0.0
        %1248 = vmatprep.subr.mxu0 0.0
        %1249 = vmatpush1.msra.mxu0 0.0
        %1250 = vmatprep.subr.mxu0 0.0
        %1251 = vmatpush1.msra.mxu0 0.0
        %1252 = vmatprep.subr.mxu0 0.0
        %1253 = vmatpush1.msra.mxu0 0.0
        %1254 = vmatprep.subr.mxu0 0.0
        %1255 = vmatpush1.msra.mxu0 0.0
        %1256 = vmatprep.subr.mxu0 0.0
        %1257 = vmatpush1.msra.mxu0 0.0
        %1258 = vmatprep.subr.mxu0 0.0
        %1259 = vmatpush1.msra.mxu0 0.0
        %1260 = vmatprep.subr.mxu0 0.0
        %1261 = vmatpush1.msra.mxu0 0.0
        %1262 = vmatprep.subr.mxu0 0.0
        %1263 = vmatpush1.msra.mxu0 0.0
        %1264 = vmatprep.subr.mxu0 0.0
        %1265 = vmatpush1.msra.mxu0 0.0
        %1266 = vmatprep.subr.mxu0 0.0
        %1267 = vmatpush1.msra.mxu0 0.0
        %1268 = vmatprep.subr.mxu0 0.0
        %1269 = vmatpush1.msra.mxu0 0.0
        %1270 = vmatprep.subr.mxu0 0.0
        %1271 = vmatpush1.msra.mxu0 0.0
        %1272 = vmatprep.subr.mxu0 0.0
        %1273 = vmatpush1.msra.mxu0 0.0
        %1274 = vmatprep.mubr.f32.mxu0 0.0
        %1275 = vmatmul.mubr.f32.gmra.mrb[0].mxu0 %v1202
        %v1276 = vpop.f32.mrb[0].mxu0
        %v1277 = vadd.f32 0.0, %v1276
        %v1278 = vpop.f32.mrb[0].mxu0
        %v1279 = vadd.f32 0.0, %v1278
        %1280 = vdwg.mxu0
        %1281 = vmatprep.subr.mxu0 0.0
        %1282 = vmatpush1.msra.mxu0 %v1208
        %1283 = vmatprep.subr.mxu0 0.0
        %1284 = vmatpush1.msra.mxu0 0.0
        %1285 = vmatprep.subr.mxu0 0.0
        %1286 = vmatpush1.msra.mxu0 0.0
        %1287 = vmatprep.subr.mxu0 0.0
        %1288 = vmatpush1.msra.mxu0 0.0
        %1289 = vmatprep.subr.mxu0 0.0
        %1290 = vmatpush1.msra.mxu0 0.0
        %1291 = vmatprep.subr.mxu0 0.0
        %1292 = vmatpush1.msra.mxu0 0.0
        %1293 = vmatprep.subr.mxu0 0.0
        %1294 = vmatpush1.msra.mxu0 0.0
        %1295 = vmatprep.subr.mxu0 0.0
        %1296 = vmatpush1.msra.mxu0 0.0
        %1297 = vmatprep.subr.mxu0 0.0
        %1298 = vmatpush1.msra.mxu0 0.0
        %1299 = vmatprep.subr.mxu0 0.0
        %1300 = vmatpush1.msra.mxu0 0.0
        %1301 = vmatprep.subr.mxu0 0.0
        %1302 = vmatpush1.msra.mxu0 0.0
        %1303 = vmatprep.subr.mxu0 0.0
        %1304 = vmatpush1.msra.mxu0 0.0
        %1305 = vmatprep.subr.mxu0 0.0
        %1306 = vmatpush1.msra.mxu0 0.0
        %1307 = vmatprep.subr.mxu0 0.0
        %1308 = vmatpush1.msra.mxu0 0.0
        %1309 = vmatprep.subr.mxu0 0.0
        %1310 = vmatpush1.msra.mxu0 0.0
        %1311 = vmatprep.subr.mxu0 0.0
        %1312 = vmatpush1.msra.mxu0 0.0
        %1313 = vmatprep.subr.mxu0 0.0
        %1314 = vmatpush1.msra.mxu0 0.0
        %1315 = vmatprep.subr.mxu0 0.0
        %1316 = vmatpush1.msra.mxu0 0.0
        %1317 = vmatprep.subr.mxu0 0.0
        %1318 = vmatpush1.msra.mxu0 0.0
        %1319 = vmatprep.subr.mxu0 0.0
        %1320 = vmatpush1.msra.mxu0 0.0
        %1321 = vmatprep.subr.mxu0 0.0
        %1322 = vmatpush1.msra.mxu0 0.0
        %1323 = vmatprep.subr.mxu0 0.0
        %1324 = vmatpush1.msra.mxu0 0.0
        %1325 = vmatprep.subr.mxu0 0.0
        %1326 = vmatpush1.msra.mxu0 0.0
        %1327 = vmatprep.subr.mxu0 0.0
        %1328 = vmatpush1.msra.mxu0 0.0
        %1329 = vmatprep.subr.mxu0 0.0
        %1330 = vmatpush1.msra.mxu0 0.0
        %1331 = vmatprep.subr.mxu0 0.0
        %1332 = vmatpush1.msra.mxu0 0.0
        %1333 = vmatprep.subr.mxu0 0.0
        %1334 = vmatpush1.msra.mxu0 0.0
        %1335 = vmatprep.subr.mxu0 0.0
        %1336 = vmatpush1.msra.mxu0 0.0
        %1337 = vmatprep.subr.mxu0 0.0
        %1338 = vmatpush1.msra.mxu0 0.0
        %1339 = vmatprep.subr.mxu0 0.0
        %1340 = vmatpush1.msra.mxu0 0.0
        %1341 = vmatprep.subr.mxu0 0.0
        %1342 = vmatpush1.msra.mxu0 0.0
        %1343 = vmatprep.subr.mxu0 0.0
        %1344 = vmatpush1.msra.mxu0 0.0
        %1345 = vmatprep.mubr.f32.mxu0 0.0
        %1346 = vmatmul.mubr.f32.gmra.mrb[0].mxu0 %v1202
        %v1347 = vpop.f32.mrb[0].mxu0
        %v1348 = vadd.f32 0.0, %v1347
        %v1349 = vpop.f32.mrb[0].mxu0
        %1350 = vdwg.mxu0
        %v1351 = vadd.f32 %v1184, %v1277
        %v1352 = vadd.f32 %v1185, %v1279
        %v1353 = vadd.f32 %v1186, %v1348
        %s1354 = scalar_lea.vmem %s1, 56
        %v1355 = vld [vmem:[%s1354] sm:$0xff]
        %1356 = vrot.lane.b32.xlu0 %v196, 91
        %v1357 = vpop.permute.xlu0 %1356
        %1358 = vrot.lane.b32.xlu0 %v203, 91
        %v1359 = vpop.permute.xlu0 %1358
        %1360 = vrot.lane.b32.xlu0 %v197, 91
        %v1361 = vpop.permute.xlu0 %1360
        %1362 = vrot.lane.b32.xlu0 %v204, 91
        %v1363 = vpop.permute.xlu0 %1362
        %vm1364 = vcmask 744448
        %v1365 = vsel %vm1364, %v1357, %v1359
        %v1366 = vsel %vm1364, %v1359, %v1361
        %v1367 = vsel %vm1364, %v1361, %v1363
        %v1369 = vsel %vm217, %v1355, 0
        %v1371 = vsel %vm221, %v1365, 0
        %v1373 = vsel %vm221, %v1366, 0
        %v1375 = vsel %vm221, %v1367, 0
        %1377 = vmatprep.subr.mxu0 %v1373
        %1378 = vmatpush1.msra.mxu0 %v1371
        %1379 = vmatprep.subr.mxu0 0.0
        %1380 = vmatpush1.msra.mxu0 0.0
        %1381 = vmatprep.subr.mxu0 0.0
        %1382 = vmatpush1.msra.mxu0 0.0
        %1383 = vmatprep.subr.mxu0 0.0
        %1384 = vmatpush1.msra.mxu0 0.0
        %1385 = vmatprep.subr.mxu0 0.0
        %1386 = vmatpush1.msra.mxu0 0.0
        %1387 = vmatprep.subr.mxu0 0.0
        %1388 = vmatpush1.msra.mxu0 0.0
        %1389 = vmatprep.subr.mxu0 0.0
        %1390 = vmatpush1.msra.mxu0 0.0
        %1391 = vmatprep.subr.mxu0 0.0
        %1392 = vmatpush1.msra.mxu0 0.0
        %1393 = vmatprep.subr.mxu0 0.0
        %1394 = vmatpush1.msra.mxu0 0.0
        %1395 = vmatprep.subr.mxu0 0.0
        %1396 = vmatpush1.msra.mxu0 0.0
        %1397 = vmatprep.subr.mxu0 0.0
        %1398 = vmatpush1.msra.mxu0 0.0
        %1399 = vmatprep.subr.mxu0 0.0
        %1400 = vmatpush1.msra.mxu0 0.0
        %1401 = vmatprep.subr.mxu0 0.0
        %1402 = vmatpush1.msra.mxu0 0.0
        %1403 = vmatprep.subr.mxu0 0.0
        %1404 = vmatpush1.msra.mxu0 0.0
        %1405 = vmatprep.subr.mxu0 0.0
        %1406 = vmatpush1.msra.mxu0 0.0
        %1407 = vmatprep.subr.mxu0 0.0
        %1408 = vmatpush1.msra.mxu0 0.0
        %1409 = vmatprep.subr.mxu0 0.0
        %1410 = vmatpush1.msra.mxu0 0.0
        %1411 = vmatprep.subr.mxu0 0.0
        %1412 = vmatpush1.msra.mxu0 0.0
        %1413 = vmatprep.subr.mxu0 0.0
        %1414 = vmatpush1.msra.mxu0 0.0
        %1415 = vmatprep.subr.mxu0 0.0
        %1416 = vmatpush1.msra.mxu0 0.0
        %1417 = vmatprep.subr.mxu0 0.0
        %1418 = vmatpush1.msra.mxu0 0.0
        %1419 = vmatprep.subr.mxu0 0.0
        %1420 = vmatpush1.msra.mxu0 0.0
        %1421 = vmatprep.subr.mxu0 0.0
        %1422 = vmatpush1.msra.mxu0 0.0
        %1423 = vmatprep.subr.mxu0 0.0
        %1424 = vmatpush1.msra.mxu0 0.0
        %1425 = vmatprep.subr.mxu0 0.0
        %1426 = vmatpush1.msra.mxu0 0.0
        %1427 = vmatprep.subr.mxu0 0.0
        %1428 = vmatpush1.msra.mxu0 0.0
        %1429 = vmatprep.subr.mxu0 0.0
        %1430 = vmatpush1.msra.mxu0 0.0
        %1431 = vmatprep.subr.mxu0 0.0
        %1432 = vmatpush1.msra.mxu0 0.0
        %1433 = vmatprep.subr.mxu0 0.0
        %1434 = vmatpush1.msra.mxu0 0.0
        %1435 = vmatprep.subr.mxu0 0.0
        %1436 = vmatpush1.msra.mxu0 0.0
        %1437 = vmatprep.subr.mxu0 0.0
        %1438 = vmatpush1.msra.mxu0 0.0
        %1439 = vmatprep.subr.mxu0 0.0
        %1440 = vmatpush1.msra.mxu0 0.0
        %1441 = vmatprep.mubr.f32.mxu0 0.0
        %1442 = vmatmul.mubr.f32.gmra.mrb[0].mxu0 %v1369
        %v1443 = vpop.f32.mrb[0].mxu0
        %v1444 = vadd.f32 0.0, %v1443
        %v1445 = vpop.f32.mrb[0].mxu0
        %v1446 = vadd.f32 0.0, %v1445
        %1447 = vdwg.mxu0
        %1448 = vmatprep.subr.mxu0 0.0
        %1449 = vmatpush1.msra.mxu0 %v1375
        %1450 = vmatprep.subr.mxu0 0.0
        %1451 = vmatpush1.msra.mxu0 0.0
        %1452 = vmatprep.subr.mxu0 0.0
        %1453 = vmatpush1.msra.mxu0 0.0
        %1454 = vmatprep.subr.mxu0 0.0
        %1455 = vmatpush1.msra.mxu0 0.0
        %1456 = vmatprep.subr.mxu0 0.0
        %1457 = vmatpush1.msra.mxu0 0.0
        %1458 = vmatprep.subr.mxu0 0.0
        %1459 = vmatpush1.msra.mxu0 0.0
        %1460 = vmatprep.subr.mxu0 0.0
        %1461 = vmatpush1.msra.mxu0 0.0
        %1462 = vmatprep.subr.mxu0 0.0
        %1463 = vmatpush1.msra.mxu0 0.0
        %1464 = vmatprep.subr.mxu0 0.0
        %1465 = vmatpush1.msra.mxu0 0.0
        %1466 = vmatprep.subr.mxu0 0.0
        %1467 = vmatpush1.msra.mxu0 0.0
        %1468 = vmatprep.subr.mxu0 0.0
        %1469 = vmatpush1.msra.mxu0 0.0
        %1470 = vmatprep.subr.mxu0 0.0
        %1471 = vmatpush1.msra.mxu0 0.0
        %1472 = vmatprep.subr.mxu0 0.0
        %1473 = vmatpush1.msra.mxu0 0.0
        %1474 = vmatprep.subr.mxu0 0.0
        %1475 = vmatpush1.msra.mxu0 0.0
        %1476 = vmatprep.subr.mxu0 0.0
        %1477 = vmatpush1.msra.mxu0 0.0
        %1478 = vmatprep.subr.mxu0 0.0
        %1479 = vmatpush1.msra.mxu0 0.0
        %1480 = vmatprep.subr.mxu0 0.0
        %1481 = vmatpush1.msra.mxu0 0.0
        %1482 = vmatprep.subr.mxu0 0.0
        %1483 = vmatpush1.msra.mxu0 0.0
        %1484 = vmatprep.subr.mxu0 0.0
        %1485 = vmatpush1.msra.mxu0 0.0
        %1486 = vmatprep.subr.mxu0 0.0
        %1487 = vmatpush1.msra.mxu0 0.0
        %1488 = vmatprep.subr.mxu0 0.0
        %1489 = vmatpush1.msra.mxu0 0.0
        %1490 = vmatprep.subr.mxu0 0.0
        %1491 = vmatpush1.msra.mxu0 0.0
        %1492 = vmatprep.subr.mxu0 0.0
        %1493 = vmatpush1.msra.mxu0 0.0
        %1494 = vmatprep.subr.mxu0 0.0
        %1495 = vmatpush1.msra.mxu0 0.0
        %1496 = vmatprep.subr.mxu0 0.0
        %1497 = vmatpush1.msra.mxu0 0.0
        %1498 = vmatprep.subr.mxu0 0.0
        %1499 = vmatpush1.msra.mxu0 0.0
        %1500 = vmatprep.subr.mxu0 0.0
        %1501 = vmatpush1.msra.mxu0 0.0
        %1502 = vmatprep.subr.mxu0 0.0
        %1503 = vmatpush1.msra.mxu0 0.0
        %1504 = vmatprep.subr.mxu0 0.0
        %1505 = vmatpush1.msra.mxu0 0.0
        %1506 = vmatprep.subr.mxu0 0.0
        %1507 = vmatpush1.msra.mxu0 0.0
        %1508 = vmatprep.subr.mxu0 0.0
        %1509 = vmatpush1.msra.mxu0 0.0
        %1510 = vmatprep.subr.mxu0 0.0
        %1511 = vmatpush1.msra.mxu0 0.0
        %1512 = vmatprep.mubr.f32.mxu0 0.0
        %1513 = vmatmul.mubr.f32.gmra.mrb[0].mxu0 %v1369
        %v1514 = vpop.f32.mrb[0].mxu0
        %v1515 = vadd.f32 0.0, %v1514
        %v1516 = vpop.f32.mrb[0].mxu0
        %1517 = vdwg.mxu0
        %v1518 = vadd.f32 %v1351, %v1444
        %v1519 = vadd.f32 %v1352, %v1446
        %v1520 = vadd.f32 %v1353, %v1515
        %s1521 = scalar_lea.vmem %s1, 64
        %v1522 = vld [vmem:[%s1521] sm:$0xff]
        %1523 = vrot.lane.b32.xlu0 %v196, 90
        %v1524 = vpop.permute.xlu0 %1523
        %1525 = vrot.lane.b32.xlu0 %v203, 90
        %v1526 = vpop.permute.xlu0 %1525
        %1527 = vrot.lane.b32.xlu0 %v197, 90
        %v1528 = vpop.permute.xlu0 %1527
        %1529 = vrot.lane.b32.xlu0 %v204, 90
        %v1530 = vpop.permute.xlu0 %1529
        %vm1531 = vcmask 736256
        %v1532 = vsel %vm1531, %v1524, %v1526
        %v1533 = vsel %vm1531, %v1526, %v1528
        %v1534 = vsel %vm1531, %v1528, %v1530
        %v1536 = vsel %vm217, %v1522, 0
        %v1538 = vsel %vm221, %v1532, 0
        %v1540 = vsel %vm221, %v1533, 0
        %v1542 = vsel %vm221, %v1534, 0
        %1544 = vmatprep.subr.mxu0 %v1540
        %1545 = vmatpush1.msra.mxu0 %v1538
        %1546 = vmatprep.subr.mxu0 0.0
        %1547 = vmatpush1.msra.mxu0 0.0
        %1548 = vmatprep.subr.mxu0 0.0
        %1549 = vmatpush1.msra.mxu0 0.0
        %1550 = vmatprep.subr.mxu0 0.0
        %1551 = vmatpush1.msra.mxu0 0.0
        %1552 = vmatprep.subr.mxu0 0.0
        %1553 = vmatpush1.msra.mxu0 0.0
        %1554 = vmatprep.subr.mxu0 0.0
        %1555 = vmatpush1.msra.mxu0 0.0
        %1556 = vmatprep.subr.mxu0 0.0
        %1557 = vmatpush1.msra.mxu0 0.0
        %1558 = vmatprep.subr.mxu0 0.0
        %1559 = vmatpush1.msra.mxu0 0.0
        %1560 = vmatprep.subr.mxu0 0.0
        %1561 = vmatpush1.msra.mxu0 0.0
        %1562 = vmatprep.subr.mxu0 0.0
        %1563 = vmatpush1.msra.mxu0 0.0
        %1564 = vmatprep.subr.mxu0 0.0
        %1565 = vmatpush1.msra.mxu0 0.0
        %1566 = vmatprep.subr.mxu0 0.0
        %1567 = vmatpush1.msra.mxu0 0.0
        %1568 = vmatprep.subr.mxu0 0.0
        %1569 = vmatpush1.msra.mxu0 0.0
        %1570 = vmatprep.subr.mxu0 0.0
        %1571 = vmatpush1.msra.mxu0 0.0
        %1572 = vmatprep.subr.mxu0 0.0
        %1573 = vmatpush1.msra.mxu0 0.0
        %1574 = vmatprep.subr.mxu0 0.0
        %1575 = vmatpush1.msra.mxu0 0.0
        %1576 = vmatprep.subr.mxu0 0.0
        %1577 = vmatpush1.msra.mxu0 0.0
        %1578 = vmatprep.subr.mxu0 0.0
        %1579 = vmatpush1.msra.mxu0 0.0
        %1580 = vmatprep.subr.mxu0 0.0
        %1581 = vmatpush1.msra.mxu0 0.0
        %1582 = vmatprep.subr.mxu0 0.0
        %1583 = vmatpush1.msra.mxu0 0.0
        %1584 = vmatprep.subr.mxu0 0.0
        %1585 = vmatpush1.msra.mxu0 0.0
        %1586 = vmatprep.subr.mxu0 0.0
        %1587 = vmatpush1.msra.mxu0 0.0
        %1588 = vmatprep.subr.mxu0 0.0
        %1589 = vmatpush1.msra.mxu0 0.0
        %1590 = vmatprep.subr.mxu0 0.0
        %1591 = vmatpush1.msra.mxu0 0.0
        %1592 = vmatprep.subr.mxu0 0.0
        %1593 = vmatpush1.msra.mxu0 0.0
        %1594 = vmatprep.subr.mxu0 0.0
        %1595 = vmatpush1.msra.mxu0 0.0
        %1596 = vmatprep.subr.mxu0 0.0
        %1597 = vmatpush1.msra.mxu0 0.0
        %1598 = vmatprep.subr.mxu0 0.0
        %1599 = vmatpush1.msra.mxu0 0.0
        %1600 = vmatprep.subr.mxu0 0.0
        %1601 = vmatpush1.msra.mxu0 0.0
        %1602 = vmatprep.subr.mxu0 0.0
        %1603 = vmatpush1.msra.mxu0 0.0
        %1604 = vmatprep.subr.mxu0 0.0
        %1605 = vmatpush1.msra.mxu0 0.0
        %1606 = vmatprep.subr.mxu0 0.0
        %1607 = vmatpush1.msra.mxu0 0.0
        %1608 = vmatprep.mubr.f32.mxu0 0.0
        %1609 = vmatmul.mubr.f32.gmra.mrb[0].mxu0 %v1536
        %v1610 = vpop.f32.mrb[0].mxu0
        %v1611 = vadd.f32 0.0, %v1610
        %v1612 = vpop.f32.mrb[0].mxu0
        %v1613 = vadd.f32 0.0, %v1612
        %1614 = vdwg.mxu0
        %1615 = vmatprep.subr.mxu0 0.0
        %1616 = vmatpush1.msra.mxu0 %v1542
        %1617 = vmatprep.subr.mxu0 0.0
        %1618 = vmatpush1.msra.mxu0 0.0
        %1619 = vmatprep.subr.mxu0 0.0
        %1620 = vmatpush1.msra.mxu0 0.0
        %1621 = vmatprep.subr.mxu0 0.0
        %1622 = vmatpush1.msra.mxu0 0.0
        %1623 = vmatprep.subr.mxu0 0.0
        %1624 = vmatpush1.msra.mxu0 0.0
        %1625 = vmatprep.subr.mxu0 0.0
        %1626 = vmatpush1.msra.mxu0 0.0
        %1627 = vmatprep.subr.mxu0 0.0
        %1628 = vmatpush1.msra.mxu0 0.0
        %1629 = vmatprep.subr.mxu0 0.0
        %1630 = vmatpush1.msra.mxu0 0.0
        %1631 = vmatprep.subr.mxu0 0.0
        %1632 = vmatpush1.msra.mxu0 0.0
        %1633 = vmatprep.subr.mxu0 0.0
        %1634 = vmatpush1.msra.mxu0 0.0
        %1635 = vmatprep.subr.mxu0 0.0
        %1636 = vmatpush1.msra.mxu0 0.0
        %1637 = vmatprep.subr.mxu0 0.0
        %1638 = vmatpush1.msra.mxu0 0.0
        %1639 = vmatprep.subr.mxu0 0.0
        %1640 = vmatpush1.msra.mxu0 0.0
        %1641 = vmatprep.subr.mxu0 0.0
        %1642 = vmatpush1.msra.mxu0 0.0
        %1643 = vmatprep.subr.mxu0 0.0
        %1644 = vmatpush1.msra.mxu0 0.0
        %1645 = vmatprep.subr.mxu0 0.0
        %1646 = vmatpush1.msra.mxu0 0.0
        %1647 = vmatprep.subr.mxu0 0.0
        %1648 = vmatpush1.msra.mxu0 0.0
        %1649 = vmatprep.subr.mxu0 0.0
        %1650 = vmatpush1.msra.mxu0 0.0
        %1651 = vmatprep.subr.mxu0 0.0
        %1652 = vmatpush1.msra.mxu0 0.0
        %1653 = vmatprep.subr.mxu0 0.0
        %1654 = vmatpush1.msra.mxu0 0.0
        %1655 = vmatprep.subr.mxu0 0.0
        %1656 = vmatpush1.msra.mxu0 0.0
        %1657 = vmatprep.subr.mxu0 0.0
        %1658 = vmatpush1.msra.mxu0 0.0
        %1659 = vmatprep.subr.mxu0 0.0
        %1660 = vmatpush1.msra.mxu0 0.0
        %1661 = vmatprep.subr.mxu0 0.0
        %1662 = vmatpush1.msra.mxu0 0.0
        %1663 = vmatprep.subr.mxu0 0.0
        %1664 = vmatpush1.msra.mxu0 0.0
        %1665 = vmatprep.subr.mxu0 0.0
        %1666 = vmatpush1.msra.mxu0 0.0
        %1667 = vmatprep.subr.mxu0 0.0
        %1668 = vmatpush1.msra.mxu0 0.0
        %1669 = vmatprep.subr.mxu0 0.0
        %1670 = vmatpush1.msra.mxu0 0.0
        %1671 = vmatprep.subr.mxu0 0.0
        %1672 = vmatpush1.msra.mxu0 0.0
        %1673 = vmatprep.subr.mxu0 0.0
        %1674 = vmatpush1.msra.mxu0 0.0
        %1675 = vmatprep.subr.mxu0 0.0
        %1676 = vmatpush1.msra.mxu0 0.0
        %1677 = vmatprep.subr.mxu0 0.0
        %1678 = vmatpush1.msra.mxu0 0.0
        %1679 = vmatprep.mubr.f32.mxu0 0.0
        %1680 = vmatmul.mubr.f32.gmra.mrb[0].mxu0 %v1536
        %v1681 = vpop.f32.mrb[0].mxu0
        %v1682 = vadd.f32 0.0, %v1681
        %v1683 = vpop.f32.mrb[0].mxu0
        %1684 = vdwg.mxu0
        %v1685 = vadd.f32 %v1518, %v1611
        %v1686 = vadd.f32 %v1519, %v1613
        %v1687 = vadd.f32 %v1520, %v1682
        %v1688 = vld [vmem:[%s3] sm:$0x7]
        %v1690 = vlaneseq
        %v1691 = vshrl.u32 %v1690, 7
        %v1692 = vsub.s32 0, %v1691
        %v1693 = vrot.slane %v1688, %v1692
        %v1694 = vlaneseq
        %v1695 = vshrl.u32 %v1694, 7
        %v1696 = vsub.s32 1, %v1695
        %v1697 = vrot.slane %v1688, %v1696
        %v1698 = vlaneseq
        %v1699 = vshrl.u32 %v1698, 7
        %v1700 = vsub.s32 2, %v1699
        %v1701 = vrot.slane %v1688, %v1700
        %v1705 = vmul.f32 %v1685, %v1693
        %v1706 = vmul.f32 %v1686, %v1697
        %v1707 = vmul.f32 %v1687, %v1701
        %v1708 = vadd.f32 %v1705, %v1706
        %v1709 = vadd.f32 %v1708, %v1707
        %1710 = vadd.xlane.f32.xlu0 %v1709
        %v1711 = vpop.xlane.xlu0 %1710
        %v1712 = vmul.f32 %v1705, %v1705
        %v1713 = vmul.f32 %v1706, %v1706
        %v1714 = vmul.f32 %v1707, %v1707
        %v1715 = vadd.f32 %v1712, %v1713
        %v1716 = vadd.f32 %v1715, %v1714
        %1717 = vadd.xlane.f32.xlu0 %v1716
        %v1718 = vpop.xlane.xlu0 %1717
        %v1719 = vmul.f32 %v1711, 0.00390625
        %v1720 = vmul.f32 %v1718, 0.00390625
        %v1721 = vmul.f32 %v1719, %v1719
        %v1722 = vsub.f32 %v1720, %v1721
        %v1723 = vmax.f32 %v1722, 0.0
        %v1724 = vld [vmem:[%s2] sm:$0xff]
        %v1725 = vadd.f32 %v1723, 1e-05
        %v1726 = vrsqrt.pop %v1725
        %v1727 = vmul.f32 %v1724, %v1726
        %1729 = vset.pattern.permute.xlu0 0
        %1730 = vperm.xlu0 %1729, %v1727
        %v1731 = vpop.permute.xlu0 %1730
        %v1733 = vmul.f32 %v1685, %v1731
        %v1734 = vmul.f32 %v1686, %v1731
        %v1735 = vmul.f32 %v1687, %v1731
        %v1736 = vmul.f32 %v1719, %v1727
        %1738 = vrot.lane.b32.xlu0 %v1736, 1
        %v1739 = vpop.permute.xlu0 %1738
        %v1741 = vsub.f32 %v1724, %v1739
        %1743 = vset.pattern.permute.xlu0 1
        %1744 = vperm.xlu0 %1743, %v1741
        %v1745 = vpop.permute.xlu0 %1744
        %v1747 = vadd.f32 %v1733, %v1745
        %v1748 = vadd.f32 %v1734, %v1745
        %v1749 = vadd.f32 %v1735, %v1745
        %v1750 = vmax.f32 %v1747, 0.0
        %v1751 = vmax.f32 %v1748, 0.0
        %v1752 = vmax.f32 %v1749, 0.0
        %1753 = vst [vmem:[%s190] sm:$0xff] %v1750
        %1754 = vst [vmem:[%s190 + $0x8] sm:$0xff] %v1751
        %1755 = vst [vmem:[%s190 + $0x10] sm:$0xff] %v1752
        %s1756 = sand.u32 %s115, 1
        %s1757 = scalar_lea.sflag [#allocation3], %s1756
        %s1758 = sand.u32 %s115, 1
        %s1759 = smul.addr %s1758, 24
        %s1760 = scalar_lea.vmem [#allocation2], %s1759
        // Predicated region
        $region37: #{tpu_custom_call.1} parent=35 // pred_check
          %p1761 = pneg %p125
        $region38: #{tpu_custom_call.1} parent=35 // pred_check_branch
          %1763 = sbr.rel (%p1761) target = $region40
        $region39: #{tpu_custom_call.1} parent=35 // pred_region
          %s1765 = ssub.s32 384, 384
          %1766 = vsyncadd %s1757, %s1765
          %s1767 = smul.addr %s18, 3
          %s1768 = smul.addr %s1767, 128
          %s1769 = scalar_lea.hbm %s4, %s1768
          %s1771 = sshll.u32 %s1760, 4
          %s1772 = int_to_ptr.vmem [resolvable:$true] %s1771
          %1774 = dma.vmem_to_hbm [thread:$0]  %s1772, 384, %s1769, %s1757
        $region40: #{tpu_custom_call.1} parent=35 // pred_fallthru
          _
      $region36: #{tpu_custom_call.1} parent=5 // pred_fallthru
        _
      %p1775 = scmp.le.s32.totalorder 2, %s13
      // Predicated region
      $region41: #{tpu_custom_call.1} parent=5 // pred_check
        %p1776 = pneg %p1775
      $region42: #{tpu_custom_call.1} parent=5 // pred_check_branch
        %1778 = sbr.rel (%p1776) target = $region44
      $region43: #{tpu_custom_call.1} parent=5 // pred_region
        %s1779 = ssub.s32 %s13, 2
        // Predicated region
        $region45: #{tpu_custom_call.1} parent=43 // pred_check
          %p1780 = pneg %p131
        $region46: #{tpu_custom_call.1} parent=43 // pred_check_branch
          %1782 = sbr.rel (%p1780) target = $region48
        $region47: #{tpu_custom_call.1} parent=43 // pred_region
          %s1783 = sand.u32 %s116, 1
          %s1784 = scalar_lea.sflag [#allocation3], %s1783
          %s1785 = sand.u32 %s116, 1
          %s1786 = smul.addr %s1785, 24
          %s1787 = scalar_lea.vmem [#allocation2], %s1786
          %1788 = dma.done %s1784, 384
        $region48: #{tpu_custom_call.1} parent=43 // pred_fallthru
          _
      $region44: #{tpu_custom_call.1} parent=5 // pred_fallthru
        _
    $region6: #{tpu_custom_call.1} parent=1 // loop_footer
      %s17 = sadd.s32 1, %s13
    $region7: #{tpu_custom_call.1} parent=1 // loop_footer_branch
      %12 = sbr.rel target = $region3
    $region8: #{tpu_custom_call.1} parent=1 // loop_exit
      _
    %1789 = vsyncpa [#allocation3], 1
    %s1790 = scalar_lea.sflag [#allocation3], 1
    %1791 = vsyncpa %s1790, 1

</llo_original>
